<compile_context>
chip_gen: v6e
topology: v6e:2x2x1
jax: 0.10.0
libtpu: 0.0.40
codegen_flags: <defaults>
</compile_context>

<pallas_src>
import functools

import jax
import jax.numpy as jnp
from jax.experimental import pallas as pl
from jax.experimental.pallas import tpu as pltpu


def _self_attn_kernel(x_ref, g_ref, beta_ref, wq_ref, wk_ref, wv_ref,
                      wout_ref, bout_ref, o_ref, *,
                      heads, dim_head, kv_chunk, exp_dtype, flat_out):
    bb, n, d = x_ref.shape
    dh = dim_head
    rows = bb * n

    # ---- LayerNorm (eps = 1e-5, elementwise affine), statistics in f32 ----
    x = x_ref[...].astype(jnp.float32).reshape(rows, d)
    mean = jnp.mean(x, axis=-1, keepdims=True)
    xc = x - mean
    var = jnp.mean(xc * xc, axis=-1, keepdims=True)
    xn = xc * jax.lax.rsqrt(var + 1e-5)
    xn = xn * g_ref[0].astype(jnp.float32) + beta_ref[0].astype(jnp.float32)
    xn_bf = xn.astype(jnp.bfloat16)

    # ---- Q/K/V projections: three bf16 matmuls with f32 accumulation ----
    # (the softmax scale was folded into W_q once in the wrapper)
    q_all = jnp.dot(xn_bf, wq_ref[...],
                    preferred_element_type=jnp.float32).astype(jnp.bfloat16)
    k_all = jnp.dot(xn_bf, wk_ref[...],
                    preferred_element_type=jnp.float32).astype(jnp.bfloat16)
    v_all = jnp.dot(xn_bf, wv_ref[...],
                    preferred_element_type=jnp.float32).astype(jnp.bfloat16)

    num_chunks = n // kv_chunk

    # Output projection fused into the head loop: a single f32 (rows, D)
    # accumulator replaces the bf16 head_scratch slab and its masked
    # sub-128-lane stores.
    proj = jnp.zeros((rows, d), dtype=jnp.float32)
    for h in range(heads):                      # heads is small & static
        sl = slice(h * dh, (h + 1) * dh)
        qh = q_all[:, sl].reshape(bb, n, dh)
        kh = k_all[:, sl].reshape(bb, n, dh)
        vh = v_all[:, sl].reshape(bb, n, dh)

        # flash-style online softmax over KV chunks: the only transient is a
        # (bb, n, kv_chunk) score tile, never the full (bb, n, n) matrix.
        m_i = jnp.full((bb, n, 1), -jnp.inf, dtype=jnp.float32)
        l_i = jnp.zeros((bb, n, 1), dtype=jnp.float32)
        acc = jnp.zeros((bb, n, dh), dtype=jnp.float32)
        for c in range(num_chunks):
            ks = kh[:, c * kv_chunk:(c + 1) * kv_chunk, :]
            vs = vh[:, c * kv_chunk:(c + 1) * kv_chunk, :]
            # batched NT matmul, contraction over dh, no K transpose materialized
            s = jnp.einsum('bqd,bkd->bqk', qh, ks,
                           preferred_element_type=jnp.float32)
            m_new = jnp.maximum(m_i, jnp.max(s, axis=-1, keepdims=True))
            alpha = jnp.exp(m_i - m_new)
            # bf16 exp -> EUP bf16 path on v6e/v7x (pass exp_dtype=f32 for v5e)
            p = jnp.exp((s - m_new).astype(exp_dtype))
            l_i = alpha * l_i + jnp.sum(p.astype(jnp.float32), axis=-1,
                                        keepdims=True)
            acc = alpha * acc + jnp.einsum('bqk,bkd->bqd',
                                           p.astype(jnp.bfloat16), vs,
                                           preferred_element_type=jnp.float32)
            m_i = m_new

        # attention dropout p = 0.0 (inference) -> identity
        # TODO(synk): train-mode dropout would use pltpu.prng_seed/prng_random_bits
        oh = acc * pl.reciprocal(l_i, approx=True)          # (bb, n, dh) f32
        oh = oh.reshape(rows, dh).astype(jnp.bfloat16)
        # fused output projection: sublane (row) slice of W_out, f32 accumulate
        proj = proj + jnp.dot(oh, wout_ref[pl.ds(h * dh, dh), :],
                              preferred_element_type=jnp.float32)

    proj = proj + bout_ref[0].astype(jnp.float32)
    if flat_out:
        # lane-dense output slab (last dim N*D): unmasked stores + dense DMA
        o_ref[...] = proj.reshape(bb, 1, n * d).astype(o_ref.dtype)
    else:
        o_ref[...] = proj.reshape(bb, n, d).astype(o_ref.dtype)


def _vmem_capacity_bytes():
    try:
        info = pltpu.get_tpu_info()
        cap = getattr(info, "vmem_capacity_bytes", None)
        if cap:
            return int(cap)
    except Exception:
        pass
    return 64 * 1024 * 1024          # conservative default (v7x physical VMEM)


def _per_step_vmem_bytes(block_b, N, D, heads, dim_head, kv_chunk, io_itemsize):
    """Rough upper bound on per-grid-step VMEM residency (bytes)."""
    inner = heads * dim_head
    rows = block_b * N
    io = 2 * 2 * rows * D * io_itemsize           # double-buffered x and out blocks
    weights = 4 * D * inner * 2 + 3 * D * 4       # bf16 W_q/W_k/W_v/W_out + f32 params
    ln = 2 * rows * D * 4                         # f32 normalized rows + f32 proj acc
    qkv = 3 * rows * inner * (4 + 2)              # f32 projections + bf16 copies
    attn = block_b * N * kv_chunk * (4 + 2 + 2)   # score tile + exp/bf16 copies
    flash = block_b * N * (dim_head * 6 + 8)      # f32 acc + m/l + bf16 head out
    return int(1.25 * (io + weights + ln + qkv + attn + flash))


def _choose_block_b(B, N, fits):
    divisors = [d for d in range(1, B + 1) if B % d == 0]
    fitting = [d for d in divisors if fits(d)] or [1]
    big_rows = [d for d in fitting if d * N >= 256]
    if big_rows:
        many_steps = [d for d in big_rows if B // d >= 4]
        return (many_steps or big_rows)[0]        # smallest -> most grid steps
    multi_step = [d for d in fitting if B // d >= 2]
    return (multi_step or fitting)[-1]            # largest block that still pipelines


def self_attention(x, gamma, beta, w_qkv, w_out, b_out, *, heads, dim_head,
                   block_b=None, kv_chunk=None, exp_dtype=jnp.bfloat16):
    """SelfAttention forward. gamma/beta/b_out use PyTorch (D,) shapes.

    Dropout prob is 0 (inference). The module's project_out=False case
    (heads == 1 and dim_head == dim) is not special-cased; pass identity
    W_out / zero b_out to emulate nn.Identity.
    """
    B, N, D = x.shape
    inner = heads * dim_head
    assert w_qkv.shape == (D, 3 * inner)
    assert w_out.shape == (inner, D)
    scale = dim_head ** -0.5

    # KV tile for the in-kernel online softmax (flash-style); full N when small.
    if kv_chunk is None:
        kv_chunk = N if N <= 512 else max(c for c in range(1, 513) if N % c == 0)
    assert N % kv_chunk == 0, "kv_chunk must divide N"

    # Per-chip VMEM budget: ~48 MiB on v7x (64 MiB), ~96 MiB on v5e/v6e (128 MiB).
    budget = min(int(0.75 * _vmem_capacity_bytes()), 112 * 1024 * 1024)
    io_itemsize = x.dtype.itemsize

    def fits(bb):
        return _per_step_vmem_bytes(bb, N, D, heads, dim_head, kv_chunk,
                                    io_itemsize) <= budget

    if block_b is None:
        block_b = _choose_block_b(B, N, fits)
    assert B % block_b == 0
    grid = (B // block_b,)

    # One-time parameter preprocessing: PyTorch (D,) vectors -> (1, D) blocks,
    # W_qkv split into aligned per-projection bf16 weights, scale folded into W_q.
    gamma2 = gamma.reshape(1, D).astype(jnp.float32)
    beta2 = beta.reshape(1, D).astype(jnp.float32)
    bout2 = b_out.reshape(1, D).astype(jnp.float32)
    w_q = (w_qkv[:, :inner] * scale).astype(jnp.bfloat16)
    w_k = w_qkv[:, inner:2 * inner].astype(jnp.bfloat16)
    w_v = w_qkv[:, 2 * inner:].astype(jnp.bfloat16)
    w_o = w_out.astype(jnp.bfloat16)

    def _param_spec(shape):
        # constant block index -> never re-DMA'd; single buffer when supported
        idx = lambda b: (0,) * len(shape)
        try:
            return pl.BlockSpec(shape, idx, pipeline_mode=pl.Buffered(1))
        except Exception:
            return pl.BlockSpec(shape, idx)

    in_specs = [
        pl.BlockSpec((block_b, N, D), lambda b: (b, 0, 0)),   # x
        _param_spec((1, D)),                                  # LN gamma
        _param_spec((1, D)),                                  # LN beta
        _param_spec((D, inner)),                              # W_q (scaled, bf16)
        _param_spec((D, inner)),                              # W_k (bf16)
        _param_spec((D, inner)),                              # W_v (bf16)
        _param_spec((inner, D)),                              # W_out (bf16)
        _param_spec((1, D)),                                  # b_out
    ]

    flops = (2 * B * N * D * 3 * inner                 # qkv projections
             + 4 * B * heads * N * N * dim_head        # q@k^T and p@v
             + 2 * B * N * inner * D                   # output projection
             + 10 * B * N * D)                         # layernorm
    cost = pl.CostEstimate(
        flops=flops,
        transcendentals=B * heads * N * N + B * N,
        bytes_accessed=2 * B * N * D * io_itemsize + 8 * D * inner + 12 * D)

    params = pltpu.CompilerParams(dimension_semantics=("parallel",),
                                  vmem_limit_bytes=budget)

    def _run(flat_out):
        kernel = functools.partial(_self_attn_kernel, heads=heads,
                                   dim_head=dim_head, kv_chunk=kv_chunk,
                                   exp_dtype=exp_dtype, flat_out=flat_out)
        if flat_out:
            out_shape = jax.ShapeDtypeStruct((B, 1, N * D), x.dtype)
            out_spec = pl.BlockSpec((block_b, 1, N * D), lambda b: (b, 0, 0))
        else:
            out_shape = jax.ShapeDtypeStruct((B, N, D), x.dtype)
            out_spec = pl.BlockSpec((block_b, N, D), lambda b: (b, 0, 0))
        out = pl.pallas_call(
            kernel, out_shape=out_shape, grid=grid,
            in_specs=in_specs, out_specs=out_spec,
            compiler_params=params, cost_estimate=cost,
        )(x, gamma2, beta2, w_q, w_k, w_v, w_o, bout2)
        return out.reshape(B, N, D)

    if D % 128 != 0:
        # Lane-dense output slab avoids masked partial stores / lane-sparse
        # writeback DMA when D < 128; fall back to the natural layout if this
        # Mosaic build cannot lower the in-kernel (rows, D)->(bb,1,N*D) relayout.
        try:
            return _run(flat_out=True)
        except Exception:
            pass
    return _run(flat_out=False)


def _reference(x, gamma, beta, w_qkv, w_out, b_out, *, heads, dim_head):
    B, N, D = x.shape
    inner = heads * dim_head
    mean = jnp.mean(x, axis=-1, keepdims=True)
    var = jnp.mean((x - mean) ** 2, axis=-1, keepdims=True)
    xn = (x - mean) / jnp.sqrt(var + 1e-5) * gamma + beta
    qkv = xn @ w_qkv
    q, k, v = jnp.split(qkv, 3, axis=-1)

    def to_heads(t):
        return t.reshape(B, N, heads, dim_head).transpose(0, 2, 1, 3)

    q, k, v = map(to_heads, (q, k, v))
    dots = jnp.einsum('bhnd,bhmd->bhnm', q, k) * (dim_head ** -0.5)
    attn = jax.nn.softmax(dots, axis=-1)
    out = jnp.einsum('bhnm,bhmd->bhnd', attn, v)
    out = out.transpose(0, 2, 1, 3).reshape(B, N, inner)
    return out @ w_out + b_out


if __name__ == "__main__":
    B, N, D = 2, 8, 32
    heads, dim_head = 4, 16
    inner = heads * dim_head

    key = jax.random.PRNGKey(0)
    kx, kq, ko, kb = jax.random.split(key, 4)

    x = jax.random.normal(kx, (B, N, D), dtype=jnp.float32)
    gamma = jnp.ones((D,), dtype=jnp.float32)
    beta = jnp.zeros((D,), dtype=jnp.float32)
    w_qkv = jax.random.normal(kq, (D, 3 * inner), dtype=jnp.float32) * 0.05
    w_out = jax.random.normal(ko, (inner, D), dtype=jnp.float32) * 0.05
    b_out = jax.random.normal(kb, (D,), dtype=jnp.float32) * 0.01

    ref = _reference(x, gamma, beta, w_qkv, w_out, b_out,
                     heads=heads, dim_head=dim_head)

    # Default config: auto block_b -> block_b=1 here, i.e. a 2-step pipelined grid.
    out = self_attention(x, gamma, beta, w_qkv, w_out, b_out,
                         heads=heads, dim_head=dim_head)
    out = jax.block_until_ready(out)
    assert out.shape == (B, N, D)
    err = float(jnp.max(jnp.abs(out - ref)))
    assert jnp.allclose(out, ref, atol=2e-2, rtol=2e-2), f"max abs err = {err}"

    # Explicitly exercise the flash-style KV-tiled online-softmax path (2 chunks).
    out2 = self_attention(x, gamma, beta, w_qkv, w_out, b_out,
                          heads=heads, dim_head=dim_head, kv_chunk=4)
    out2 = jax.block_until_ready(out2)
    err2 = float(jnp.max(jnp.abs(out2 - ref)))
    assert jnp.allclose(out2, ref, atol=2e-2, rtol=2e-2), \
        f"max abs err (tiled) = {err2}"

    print("KERNEL_OK")
</pallas_src>

<mosaic_0001>
module attributes {stable_mosaic.version = 11 : i64} {
  func.func @_self_attn_kernel(%arg0: i32, %arg1: memref<1x8x32xf32, #tpu.memory_space<vmem>>, %arg2: memref<1x32xf32, #tpu.memory_space<vmem>>, %arg3: memref<1x32xf32, #tpu.memory_space<vmem>>, %arg4: memref<32x64xbf16, #tpu.memory_space<vmem>>, %arg5: memref<32x64xbf16, #tpu.memory_space<vmem>>, %arg6: memref<32x64xbf16, #tpu.memory_space<vmem>>, %arg7: memref<64x32xbf16, #tpu.memory_space<vmem>>, %arg8: memref<1x32xf32, #tpu.memory_space<vmem>>, %arg9: memref<1x1x256xf32, #tpu.memory_space<vmem>>) attributes {dimension_semantics = [#tpu.dimension_semantics<parallel>], iteration_bounds = array<i64: 2>, scalar_prefetch = 0 : i64, scratch_operands = 0 : i64, tpu.core_type = #tpu.core_type<tc>, window_params = [{transform_indices = @transform_0, window_bounds = array<i64: 1, 8, 32>}, {pipeline_mode = #tpu.pipeline_mode<synchronous>, transform_indices = @transform_1, window_bounds = array<i64: 1, 32>}, {pipeline_mode = #tpu.pipeline_mode<synchronous>, transform_indices = @transform_2, window_bounds = array<i64: 1, 32>}, {pipeline_mode = #tpu.pipeline_mode<synchronous>, transform_indices = @transform_3, window_bounds = array<i64: 32, 64>}, {pipeline_mode = #tpu.pipeline_mode<synchronous>, transform_indices = @transform_4, window_bounds = array<i64: 32, 64>}, {pipeline_mode = #tpu.pipeline_mode<synchronous>, transform_indices = @transform_5, window_bounds = array<i64: 32, 64>}, {pipeline_mode = #tpu.pipeline_mode<synchronous>, transform_indices = @transform_6, window_bounds = array<i64: 64, 32>}, {pipeline_mode = #tpu.pipeline_mode<synchronous>, transform_indices = @transform_7, window_bounds = array<i64: 1, 32>}, {transform_indices = @transform_8, window_bounds = array<i64: 1, 1, 256>}]} {
    %c0 = arith.constant 0 : index
    %c0_0 = arith.constant 0 : index
    %c0_1 = arith.constant 0 : index
    %0 = vector.load %arg1[%c0, %c0_0, %c0_1] : memref<1x8x32xf32, #tpu.memory_space<vmem>>, vector<1x8x32xf32>
    %1 = vector.shape_cast %0 : vector<1x8x32xf32> to vector<8x32xf32>
    %cst = arith.constant dense<0.000000e+00> : vector<8xf32>
    %2 = vector.multi_reduction <add>, %1, %cst [1] : vector<8x32xf32> to vector<8xf32>
    %3 = vector.shape_cast %2 : vector<8xf32> to vector<8x1xf32>
    %cst_2 = arith.constant 3.200000e+01 : f32
    %4 = vector.broadcast %cst_2 : f32 to vector<8x1xf32>
    %5 = arith.divf %3, %4 : vector<8x1xf32>
    %6 = vector.broadcast %5 : vector<8x1xf32> to vector<8x32xf32>
    %7 = arith.subf %1, %6 : vector<8x32xf32>
    %8 = arith.mulf %7, %7 : vector<8x32xf32>
    %cst_3 = arith.constant dense<0.000000e+00> : vector<8xf32>
    %9 = vector.multi_reduction <add>, %8, %cst_3 [1] : vector<8x32xf32> to vector<8xf32>
    %10 = vector.shape_cast %9 : vector<8xf32> to vector<8x1xf32>
    %cst_4 = arith.constant 3.200000e+01 : f32
    %11 = vector.broadcast %cst_4 : f32 to vector<8x1xf32>
    %12 = arith.divf %10, %11 : vector<8x1xf32>
    %cst_5 = arith.constant 9.99999974E-6 : f32
    %13 = vector.broadcast %cst_5 : f32 to vector<8x1xf32>
    %14 = arith.addf %12, %13 : vector<8x1xf32>
    %15 = math.rsqrt %14 : vector<8x1xf32>
    %16 = vector.broadcast %15 : vector<8x1xf32> to vector<8x32xf32>
    %17 = arith.mulf %7, %16 : vector<8x32xf32>
    %c0_6 = arith.constant 0 : index
    %c0_7 = arith.constant 0 : index
    %18 = vector.load %arg2[%c0_6, %c0_7] : memref<1x32xf32, #tpu.memory_space<vmem>>, vector<1x32xf32>
    %19 = vector.shape_cast %18 : vector<1x32xf32> to vector<32xf32>
    %20 = vector.shape_cast %19 : vector<32xf32> to vector<1x32xf32>
    %21 = vector.broadcast %20 : vector<1x32xf32> to vector<8x32xf32>
    %22 = arith.mulf %17, %21 : vector<8x32xf32>
    %c0_8 = arith.constant 0 : index
    %c0_9 = arith.constant 0 : index
    %23 = vector.load %arg3[%c0_8, %c0_9] : memref<1x32xf32, #tpu.memory_space<vmem>>, vector<1x32xf32>
    %24 = vector.shape_cast %23 : vector<1x32xf32> to vector<32xf32>
    %25 = vector.shape_cast %24 : vector<32xf32> to vector<1x32xf32>
    %26 = vector.broadcast %25 : vector<1x32xf32> to vector<8x32xf32>
    %27 = arith.addf %22, %26 : vector<8x32xf32>
    %28 = arith.truncf %27 : vector<8x32xf32> to vector<8x32xbf16>
    %c0_10 = arith.constant 0 : index
    %c0_11 = arith.constant 0 : index
    %29 = vector.load %arg4[%c0_10, %c0_11] : memref<32x64xbf16, #tpu.memory_space<vmem>>, vector<32x64xbf16>
    %cst_12 = arith.constant dense<0.000000e+00> : vector<8x64xf32>
    %30 = tpu.matmul %28, %29, %cst_12 {dimension_numbers = #tpu.dot_dimension_numbers<[1], [0], [0], [1], [0, 0, 1, 1], [], []>} : vector<8x32xbf16>, vector<32x64xbf16>, vector<8x64xf32> -> vector<8x64xf32>
    %31 = arith.truncf %30 : vector<8x64xf32> to vector<8x64xbf16>
    %c0_13 = arith.constant 0 : index
    %c0_14 = arith.constant 0 : index
    %32 = vector.load %arg5[%c0_13, %c0_14] : memref<32x64xbf16, #tpu.memory_space<vmem>>, vector<32x64xbf16>
    %cst_15 = arith.constant dense<0.000000e+00> : vector<8x64xf32>
    %33 = tpu.matmul %28, %32, %cst_15 {dimension_numbers = #tpu.dot_dimension_numbers<[1], [0], [0], [1], [0, 0, 1, 1], [], []>} : vector<8x32xbf16>, vector<32x64xbf16>, vector<8x64xf32> -> vector<8x64xf32>
    %34 = arith.truncf %33 : vector<8x64xf32> to vector<8x64xbf16>
    %c0_16 = arith.constant 0 : index
    %c0_17 = arith.constant 0 : index
    %35 = vector.load %arg6[%c0_16, %c0_17] : memref<32x64xbf16, #tpu.memory_space<vmem>>, vector<32x64xbf16>
    %cst_18 = arith.constant dense<0.000000e+00> : vector<8x64xf32>
    %36 = tpu.matmul %28, %35, %cst_18 {dimension_numbers = #tpu.dot_dimension_numbers<[1], [0], [0], [1], [0, 0, 1, 1], [], []>} : vector<8x32xbf16>, vector<32x64xbf16>, vector<8x64xf32> -> vector<8x64xf32>
    %37 = arith.truncf %36 : vector<8x64xf32> to vector<8x64xbf16>
    %cst_19 = arith.constant 0.000000e+00 : f32
    %38 = vector.broadcast %cst_19 : f32 to vector<8x32xf32>
    %39 = vector.extract_strided_slice %31 {offsets = [0, 0], sizes = [8, 16], strides = [1, 1]} : vector<8x64xbf16> to vector<8x16xbf16>
    %40 = vector.shape_cast %39 : vector<8x16xbf16> to vector<1x8x16xbf16>
    %41 = vector.extract_strided_slice %34 {offsets = [0, 0], sizes = [8, 16], strides = [1, 1]} : vector<8x64xbf16> to vector<8x16xbf16>
    %42 = vector.shape_cast %41 : vector<8x16xbf16> to vector<1x8x16xbf16>
    %43 = vector.extract_strided_slice %37 {offsets = [0, 0], sizes = [8, 16], strides = [1, 1]} : vector<8x64xbf16> to vector<8x16xbf16>
    %44 = vector.shape_cast %43 : vector<8x16xbf16> to vector<1x8x16xbf16>
    %cst_20 = arith.constant 0xFF800000 : f32
    %45 = vector.broadcast %cst_20 : f32 to vector<1x8x1xf32>
    %cst_21 = arith.constant 0.000000e+00 : f32
    %46 = vector.broadcast %cst_21 : f32 to vector<1x8x1xf32>
    %cst_22 = arith.constant 0.000000e+00 : f32
    %47 = vector.broadcast %cst_22 : f32 to vector<1x8x16xf32>
    "tpu.trace_start"() <{level = 10 : i32, message = "bqd,bkd->bqk"}> : () -> ()
    %cst_23 = arith.constant dense<0.000000e+00> : vector<1x8x8xf32>
    %48 = tpu.matmul %40, %42, %cst_23 {dimension_numbers = #tpu.dot_dimension_numbers<[2], [2], [1], [1], [0, 0, 0, 1, 1, 1], [0], [0]>} : vector<1x8x16xbf16>, vector<1x8x16xbf16>, vector<1x8x8xf32> -> vector<1x8x8xf32>
    "tpu.trace_stop"() : () -> ()
    %cst_24 = arith.constant dense<0xFF800000> : vector<1x8xf32>
    %49 = vector.multi_reduction <maximumf>, %48, %cst_24 [2] : vector<1x8x8xf32> to vector<1x8xf32>
    %50 = vector.shape_cast %49 : vector<1x8xf32> to vector<1x8x1xf32>
    %51 = arith.maximumf %45, %50 : vector<1x8x1xf32>
    %52 = arith.subf %45, %51 : vector<1x8x1xf32>
    %53 = math.exp %52 : vector<1x8x1xf32>
    %54 = vector.broadcast %51 : vector<1x8x1xf32> to vector<1x8x8xf32>
    %55 = arith.subf %48, %54 : vector<1x8x8xf32>
    %56 = arith.truncf %55 : vector<1x8x8xf32> to vector<1x8x8xbf16>
    %57 = math.exp %56 : vector<1x8x8xbf16>
    %58 = arith.mulf %53, %46 : vector<1x8x1xf32>
    %59 = arith.extf %57 : vector<1x8x8xbf16> to vector<1x8x8xf32>
    %cst_25 = arith.constant dense<0.000000e+00> : vector<1x8xf32>
    %60 = vector.multi_reduction <add>, %59, %cst_25 [2] : vector<1x8x8xf32> to vector<1x8xf32>
    %61 = vector.shape_cast %60 : vector<1x8xf32> to vector<1x8x1xf32>
    %62 = arith.addf %58, %61 : vector<1x8x1xf32>
    %63 = vector.broadcast %53 : vector<1x8x1xf32> to vector<1x8x16xf32>
    %64 = arith.mulf %63, %47 : vector<1x8x16xf32>
    "tpu.trace_start"() <{level = 10 : i32, message = "bqk,bkd->bqd"}> : () -> ()
    %cst_26 = arith.constant dense<0.000000e+00> : vector<1x8x16xf32>
    %65 = tpu.matmul %57, %44, %cst_26 {dimension_numbers = #tpu.dot_dimension_numbers<[2], [1], [1], [2], [0, 0, 0, 1, 1, 2], [0], [0]>} : vector<1x8x8xbf16>, vector<1x8x16xbf16>, vector<1x8x16xf32> -> vector<1x8x16xf32>
    "tpu.trace_stop"() : () -> ()
    %66 = arith.addf %64, %65 : vector<1x8x16xf32>
    %67 = tpu.reciprocal %62 {approx = true} : vector<1x8x1xf32> -> vector<1x8x1xf32>
    %68 = vector.broadcast %67 : vector<1x8x1xf32> to vector<1x8x16xf32>
    %69 = arith.mulf %66, %68 : vector<1x8x16xf32>
    %70 = vector.shape_cast %69 : vector<1x8x16xf32> to vector<8x16xf32>
    %71 = arith.truncf %70 : vector<8x16xf32> to vector<8x16xbf16>
    %c0_27 = arith.constant 0 : index
    %c0_28 = arith.constant 0 : index
    %72 = vector.load %arg7[%c0_27, %c0_28] : memref<64x32xbf16, #tpu.memory_space<vmem>>, vector<16x32xbf16>
    %cst_29 = arith.constant dense<0.000000e+00> : vector<8x32xf32>
    %73 = tpu.matmul %71, %72, %cst_29 {dimension_numbers = #tpu.dot_dimension_numbers<[1], [0], [0], [1], [0, 0, 1, 1], [], []>} : vector<8x16xbf16>, vector<16x32xbf16>, vector<8x32xf32> -> vector<8x32xf32>
    %74 = arith.addf %38, %73 : vector<8x32xf32>
    %75 = vector.extract_strided_slice %31 {offsets = [0, 16], sizes = [8, 16], strides = [1, 1]} : vector<8x64xbf16> to vector<8x16xbf16>
    %76 = vector.shape_cast %75 : vector<8x16xbf16> to vector<1x8x16xbf16>
    %77 = vector.extract_strided_slice %34 {offsets = [0, 16], sizes = [8, 16], strides = [1, 1]} : vector<8x64xbf16> to vector<8x16xbf16>
    %78 = vector.shape_cast %77 : vector<8x16xbf16> to vector<1x8x16xbf16>
    %79 = vector.extract_strided_slice %37 {offsets = [0, 16], sizes = [8, 16], strides = [1, 1]} : vector<8x64xbf16> to vector<8x16xbf16>
    %80 = vector.shape_cast %79 : vector<8x16xbf16> to vector<1x8x16xbf16>
    %cst_30 = arith.constant 0xFF800000 : f32
    %81 = vector.broadcast %cst_30 : f32 to vector<1x8x1xf32>
    %cst_31 = arith.constant 0.000000e+00 : f32
    %82 = vector.broadcast %cst_31 : f32 to vector<1x8x1xf32>
    %cst_32 = arith.constant 0.000000e+00 : f32
    %83 = vector.broadcast %cst_32 : f32 to vector<1x8x16xf32>
    "tpu.trace_start"() <{level = 10 : i32, message = "bqd,bkd->bqk"}> : () -> ()
    %cst_33 = arith.constant dense<0.000000e+00> : vector<1x8x8xf32>
    %84 = tpu.matmul %76, %78, %cst_33 {dimension_numbers = #tpu.dot_dimension_numbers<[2], [2], [1], [1], [0, 0, 0, 1, 1, 1], [0], [0]>} : vector<1x8x16xbf16>, vector<1x8x16xbf16>, vector<1x8x8xf32> -> vector<1x8x8xf32>
    "tpu.trace_stop"() : () -> ()
    %cst_34 = arith.constant dense<0xFF800000> : vector<1x8xf32>
    %85 = vector.multi_reduction <maximumf>, %84, %cst_34 [2] : vector<1x8x8xf32> to vector<1x8xf32>
    %86 = vector.shape_cast %85 : vector<1x8xf32> to vector<1x8x1xf32>
    %87 = arith.maximumf %81, %86 : vector<1x8x1xf32>
    %88 = arith.subf %81, %87 : vector<1x8x1xf32>
    %89 = math.exp %88 : vector<1x8x1xf32>
    %90 = vector.broadcast %87 : vector<1x8x1xf32> to vector<1x8x8xf32>
    %91 = arith.subf %84, %90 : vector<1x8x8xf32>
    %92 = arith.truncf %91 : vector<1x8x8xf32> to vector<1x8x8xbf16>
    %93 = math.exp %92 : vector<1x8x8xbf16>
    %94 = arith.mulf %89, %82 : vector<1x8x1xf32>
    %95 = arith.extf %93 : vector<1x8x8xbf16> to vector<1x8x8xf32>
    %cst_35 = arith.constant dense<0.000000e+00> : vector<1x8xf32>
    %96 = vector.multi_reduction <add>, %95, %cst_35 [2] : vector<1x8x8xf32> to vector<1x8xf32>
    %97 = vector.shape_cast %96 : vector<1x8xf32> to vector<1x8x1xf32>
    %98 = arith.addf %94, %97 : vector<1x8x1xf32>
    %99 = vector.broadcast %89 : vector<1x8x1xf32> to vector<1x8x16xf32>
    %100 = arith.mulf %99, %83 : vector<1x8x16xf32>
    "tpu.trace_start"() <{level = 10 : i32, message = "bqk,bkd->bqd"}> : () -> ()
    %cst_36 = arith.constant dense<0.000000e+00> : vector<1x8x16xf32>
    %101 = tpu.matmul %93, %80, %cst_36 {dimension_numbers = #tpu.dot_dimension_numbers<[2], [1], [1], [2], [0, 0, 0, 1, 1, 2], [0], [0]>} : vector<1x8x8xbf16>, vector<1x8x16xbf16>, vector<1x8x16xf32> -> vector<1x8x16xf32>
    "tpu.trace_stop"() : () -> ()
    %102 = arith.addf %100, %101 : vector<1x8x16xf32>
    %103 = tpu.reciprocal %98 {approx = true} : vector<1x8x1xf32> -> vector<1x8x1xf32>
    %104 = vector.broadcast %103 : vector<1x8x1xf32> to vector<1x8x16xf32>
    %105 = arith.mulf %102, %104 : vector<1x8x16xf32>
    %106 = vector.shape_cast %105 : vector<1x8x16xf32> to vector<8x16xf32>
    %107 = arith.truncf %106 : vector<8x16xf32> to vector<8x16xbf16>
    %c16 = arith.constant 16 : index
    %c0_37 = arith.constant 0 : index
    %108 = vector.load %arg7[%c16, %c0_37] : memref<64x32xbf16, #tpu.memory_space<vmem>>, vector<16x32xbf16>
    %cst_38 = arith.constant dense<0.000000e+00> : vector<8x32xf32>
    %109 = tpu.matmul %107, %108, %cst_38 {dimension_numbers = #tpu.dot_dimension_numbers<[1], [0], [0], [1], [0, 0, 1, 1], [], []>} : vector<8x16xbf16>, vector<16x32xbf16>, vector<8x32xf32> -> vector<8x32xf32>
    %110 = arith.addf %74, %109 : vector<8x32xf32>
    %111 = vector.extract_strided_slice %31 {offsets = [0, 32], sizes = [8, 16], strides = [1, 1]} : vector<8x64xbf16> to vector<8x16xbf16>
    %112 = vector.shape_cast %111 : vector<8x16xbf16> to vector<1x8x16xbf16>
    %113 = vector.extract_strided_slice %34 {offsets = [0, 32], sizes = [8, 16], strides = [1, 1]} : vector<8x64xbf16> to vector<8x16xbf16>
    %114 = vector.shape_cast %113 : vector<8x16xbf16> to vector<1x8x16xbf16>
    %115 = vector.extract_strided_slice %37 {offsets = [0, 32], sizes = [8, 16], strides = [1, 1]} : vector<8x64xbf16> to vector<8x16xbf16>
    %116 = vector.shape_cast %115 : vector<8x16xbf16> to vector<1x8x16xbf16>
    %cst_39 = arith.constant 0xFF800000 : f32
    %117 = vector.broadcast %cst_39 : f32 to vector<1x8x1xf32>
    %cst_40 = arith.constant 0.000000e+00 : f32
    %118 = vector.broadcast %cst_40 : f32 to vector<1x8x1xf32>
    %cst_41 = arith.constant 0.000000e+00 : f32
    %119 = vector.broadcast %cst_41 : f32 to vector<1x8x16xf32>
    "tpu.trace_start"() <{level = 10 : i32, message = "bqd,bkd->bqk"}> : () -> ()
    %cst_42 = arith.constant dense<0.000000e+00> : vector<1x8x8xf32>
    %120 = tpu.matmul %112, %114, %cst_42 {dimension_numbers = #tpu.dot_dimension_numbers<[2], [2], [1], [1], [0, 0, 0, 1, 1, 1], [0], [0]>} : vector<1x8x16xbf16>, vector<1x8x16xbf16>, vector<1x8x8xf32> -> vector<1x8x8xf32>
    "tpu.trace_stop"() : () -> ()
    %cst_43 = arith.constant dense<0xFF800000> : vector<1x8xf32>
    %121 = vector.multi_reduction <maximumf>, %120, %cst_43 [2] : vector<1x8x8xf32> to vector<1x8xf32>
    %122 = vector.shape_cast %121 : vector<1x8xf32> to vector<1x8x1xf32>
    %123 = arith.maximumf %117, %122 : vector<1x8x1xf32>
    %124 = arith.subf %117, %123 : vector<1x8x1xf32>
    %125 = math.exp %124 : vector<1x8x1xf32>
    %126 = vector.broadcast %123 : vector<1x8x1xf32> to vector<1x8x8xf32>
    %127 = arith.subf %120, %126 : vector<1x8x8xf32>
    %128 = arith.truncf %127 : vector<1x8x8xf32> to vector<1x8x8xbf16>
    %129 = math.exp %128 : vector<1x8x8xbf16>
    %130 = arith.mulf %125, %118 : vector<1x8x1xf32>
    %131 = arith.extf %129 : vector<1x8x8xbf16> to vector<1x8x8xf32>
    %cst_44 = arith.constant dense<0.000000e+00> : vector<1x8xf32>
    %132 = vector.multi_reduction <add>, %131, %cst_44 [2] : vector<1x8x8xf32> to vector<1x8xf32>
    %133 = vector.shape_cast %132 : vector<1x8xf32> to vector<1x8x1xf32>
    %134 = arith.addf %130, %133 : vector<1x8x1xf32>
    %135 = vector.broadcast %125 : vector<1x8x1xf32> to vector<1x8x16xf32>
    %136 = arith.mulf %135, %119 : vector<1x8x16xf32>
    "tpu.trace_start"() <{level = 10 : i32, message = "bqk,bkd->bqd"}> : () -> ()
    %cst_45 = arith.constant dense<0.000000e+00> : vector<1x8x16xf32>
    %137 = tpu.matmul %129, %116, %cst_45 {dimension_numbers = #tpu.dot_dimension_numbers<[2], [1], [1], [2], [0, 0, 0, 1, 1, 2], [0], [0]>} : vector<1x8x8xbf16>, vector<1x8x16xbf16>, vector<1x8x16xf32> -> vector<1x8x16xf32>
    "tpu.trace_stop"() : () -> ()
    %138 = arith.addf %136, %137 : vector<1x8x16xf32>
    %139 = tpu.reciprocal %134 {approx = true} : vector<1x8x1xf32> -> vector<1x8x1xf32>
    %140 = vector.broadcast %139 : vector<1x8x1xf32> to vector<1x8x16xf32>
    %141 = arith.mulf %138, %140 : vector<1x8x16xf32>
    %142 = vector.shape_cast %141 : vector<1x8x16xf32> to vector<8x16xf32>
    %143 = arith.truncf %142 : vector<8x16xf32> to vector<8x16xbf16>
    %c32 = arith.constant 32 : index
    %c0_46 = arith.constant 0 : index
    %144 = vector.load %arg7[%c32, %c0_46] : memref<64x32xbf16, #tpu.memory_space<vmem>>, vector<16x32xbf16>
    %cst_47 = arith.constant dense<0.000000e+00> : vector<8x32xf32>
    %145 = tpu.matmul %143, %144, %cst_47 {dimension_numbers = #tpu.dot_dimension_numbers<[1], [0], [0], [1], [0, 0, 1, 1], [], []>} : vector<8x16xbf16>, vector<16x32xbf16>, vector<8x32xf32> -> vector<8x32xf32>
    %146 = arith.addf %110, %145 : vector<8x32xf32>
    %147 = vector.extract_strided_slice %31 {offsets = [0, 48], sizes = [8, 16], strides = [1, 1]} : vector<8x64xbf16> to vector<8x16xbf16>
    %148 = vector.shape_cast %147 : vector<8x16xbf16> to vector<1x8x16xbf16>
    %149 = vector.extract_strided_slice %34 {offsets = [0, 48], sizes = [8, 16], strides = [1, 1]} : vector<8x64xbf16> to vector<8x16xbf16>
    %150 = vector.shape_cast %149 : vector<8x16xbf16> to vector<1x8x16xbf16>
    %151 = vector.extract_strided_slice %37 {offsets = [0, 48], sizes = [8, 16], strides = [1, 1]} : vector<8x64xbf16> to vector<8x16xbf16>
    %152 = vector.shape_cast %151 : vector<8x16xbf16> to vector<1x8x16xbf16>
    %cst_48 = arith.constant 0xFF800000 : f32
    %153 = vector.broadcast %cst_48 : f32 to vector<1x8x1xf32>
    %cst_49 = arith.constant 0.000000e+00 : f32
    %154 = vector.broadcast %cst_49 : f32 to vector<1x8x1xf32>
    %cst_50 = arith.constant 0.000000e+00 : f32
    %155 = vector.broadcast %cst_50 : f32 to vector<1x8x16xf32>
    "tpu.trace_start"() <{level = 10 : i32, message = "bqd,bkd->bqk"}> : () -> ()
    %cst_51 = arith.constant dense<0.000000e+00> : vector<1x8x8xf32>
    %156 = tpu.matmul %148, %150, %cst_51 {dimension_numbers = #tpu.dot_dimension_numbers<[2], [2], [1], [1], [0, 0, 0, 1, 1, 1], [0], [0]>} : vector<1x8x16xbf16>, vector<1x8x16xbf16>, vector<1x8x8xf32> -> vector<1x8x8xf32>
    "tpu.trace_stop"() : () -> ()
    %cst_52 = arith.constant dense<0xFF800000> : vector<1x8xf32>
    %157 = vector.multi_reduction <maximumf>, %156, %cst_52 [2] : vector<1x8x8xf32> to vector<1x8xf32>
    %158 = vector.shape_cast %157 : vector<1x8xf32> to vector<1x8x1xf32>
    %159 = arith.maximumf %153, %158 : vector<1x8x1xf32>
    %160 = arith.subf %153, %159 : vector<1x8x1xf32>
    %161 = math.exp %160 : vector<1x8x1xf32>
    %162 = vector.broadcast %159 : vector<1x8x1xf32> to vector<1x8x8xf32>
    %163 = arith.subf %156, %162 : vector<1x8x8xf32>
    %164 = arith.truncf %163 : vector<1x8x8xf32> to vector<1x8x8xbf16>
    %165 = math.exp %164 : vector<1x8x8xbf16>
    %166 = arith.mulf %161, %154 : vector<1x8x1xf32>
    %167 = arith.extf %165 : vector<1x8x8xbf16> to vector<1x8x8xf32>
    %cst_53 = arith.constant dense<0.000000e+00> : vector<1x8xf32>
    %168 = vector.multi_reduction <add>, %167, %cst_53 [2] : vector<1x8x8xf32> to vector<1x8xf32>
    %169 = vector.shape_cast %168 : vector<1x8xf32> to vector<1x8x1xf32>
    %170 = arith.addf %166, %169 : vector<1x8x1xf32>
    %171 = vector.broadcast %161 : vector<1x8x1xf32> to vector<1x8x16xf32>
    %172 = arith.mulf %171, %155 : vector<1x8x16xf32>
    "tpu.trace_start"() <{level = 10 : i32, message = "bqk,bkd->bqd"}> : () -> ()
    %cst_54 = arith.constant dense<0.000000e+00> : vector<1x8x16xf32>
    %173 = tpu.matmul %165, %152, %cst_54 {dimension_numbers = #tpu.dot_dimension_numbers<[2], [1], [1], [2], [0, 0, 0, 1, 1, 2], [0], [0]>} : vector<1x8x8xbf16>, vector<1x8x16xbf16>, vector<1x8x16xf32> -> vector<1x8x16xf32>
    "tpu.trace_stop"() : () -> ()
    %174 = arith.addf %172, %173 : vector<1x8x16xf32>
    %175 = tpu.reciprocal %170 {approx = true} : vector<1x8x1xf32> -> vector<1x8x1xf32>
    %176 = vector.broadcast %175 : vector<1x8x1xf32> to vector<1x8x16xf32>
    %177 = arith.mulf %174, %176 : vector<1x8x16xf32>
    %178 = vector.shape_cast %177 : vector<1x8x16xf32> to vector<8x16xf32>
    %179 = arith.truncf %178 : vector<8x16xf32> to vector<8x16xbf16>
    %c48 = arith.constant 48 : index
    %c0_55 = arith.constant 0 : index
    %180 = vector.load %arg7[%c48, %c0_55] : memref<64x32xbf16, #tpu.memory_space<vmem>>, vector<16x32xbf16>
    %cst_56 = arith.constant dense<0.000000e+00> : vector<8x32xf32>
    %181 = tpu.matmul %179, %180, %cst_56 {dimension_numbers = #tpu.dot_dimension_numbers<[1], [0], [0], [1], [0, 0, 1, 1], [], []>} : vector<8x16xbf16>, vector<16x32xbf16>, vector<8x32xf32> -> vector<8x32xf32>
    %182 = arith.addf %146, %181 : vector<8x32xf32>
    %c0_57 = arith.constant 0 : index
    %c0_58 = arith.constant 0 : index
    %183 = vector.load %arg8[%c0_57, %c0_58] : memref<1x32xf32, #tpu.memory_space<vmem>>, vector<1x32xf32>
    %184 = vector.shape_cast %183 : vector<1x32xf32> to vector<32xf32>
    %185 = vector.shape_cast %184 : vector<32xf32> to vector<1x32xf32>
    %186 = vector.broadcast %185 : vector<1x32xf32> to vector<8x32xf32>
    %187 = arith.addf %182, %186 : vector<8x32xf32>
    %188 = vector.shape_cast %187 : vector<8x32xf32> to vector<1x1x256xf32>
    %c0_59 = arith.constant 0 : index
    %c0_60 = arith.constant 0 : index
    %c0_61 = arith.constant 0 : index
    %189 = vector.load %arg9[%c0_59, %c0_60, %c0_61] : memref<1x1x256xf32, #tpu.memory_space<vmem>>, vector<1x1x256xf32>
    tpu.vector_store %arg9[%c0_59, %c0_60, %c0_61], %188 {strides = array<i32>} : memref<1x1x256xf32, #tpu.memory_space<vmem>>, vector<1x1x256xf32>,
    return
  }
  func.func @transform_0(%arg0: i32) -> (i32, i32, i32) {
    %c0_i32 = arith.constant 0 : i32
    %c0_i32_0 = arith.constant 0 : i32
    %c0_i32_1 = arith.constant 0 : i32
    return %arg0, %c0_i32, %c0_i32_0 : i32, i32, i32
  }
  func.func @transform_1(%arg0: i32) -> (i32, i32) {
    %c0_i32 = arith.constant 0 : i32
    %c0_i32_0 = arith.constant 0 : i32
    %c0_i32_1 = arith.constant 0 : i32
    return %c0_i32, %c0_i32_0 : i32, i32
  }
  func.func @transform_2(%arg0: i32) -> (i32, i32) {
    %c0_i32 = arith.constant 0 : i32
    %c0_i32_0 = arith.constant 0 : i32
    %c0_i32_1 = arith.constant 0 : i32
    return %c0_i32, %c0_i32_0 : i32, i32
  }
  func.func @transform_3(%arg0: i32) -> (i32, i32) {
    %c0_i32 = arith.constant 0 : i32
    %c0_i32_0 = arith.constant 0 : i32
    %c0_i32_1 = arith.constant 0 : i32
    return %c0_i32, %c0_i32_0 : i32, i32
  }
  func.func @transform_4(%arg0: i32) -> (i32, i32) {
    %c0_i32 = arith.constant 0 : i32
    %c0_i32_0 = arith.constant 0 : i32
    %c0_i32_1 = arith.constant 0 : i32
    return %c0_i32, %c0_i32_0 : i32, i32
  }
  func.func @transform_5(%arg0: i32) -> (i32, i32) {
    %c0_i32 = arith.constant 0 : i32
    %c0_i32_0 = arith.constant 0 : i32
    %c0_i32_1 = arith.constant 0 : i32
    return %c0_i32, %c0_i32_0 : i32, i32
  }
  func.func @transform_6(%arg0: i32) -> (i32, i32) {
    %c0_i32 = arith.constant 0 : i32
    %c0_i32_0 = arith.constant 0 : i32
    %c0_i32_1 = arith.constant 0 : i32
    return %c0_i32, %c0_i32_0 : i32, i32
  }
  func.func @transform_7(%arg0: i32) -> (i32, i32) {
    %c0_i32 = arith.constant 0 : i32
    %c0_i32_0 = arith.constant 0 : i32
    %c0_i32_1 = arith.constant 0 : i32
    return %c0_i32, %c0_i32_0 : i32, i32
  }
  func.func @transform_8(%arg0: i32) -> (i32, i32, i32) {
    %c0_i32 = arith.constant 0 : i32
    %c0_i32_0 = arith.constant 0 : i32
    %c0_i32_1 = arith.constant 0 : i32
    return %arg0, %c0_i32, %c0_i32_0 : i32, i32, i32
  }
}

module attributes {stable_mosaic.version = 11 : i64} {
  func.func @_self_attn_kernel(%arg0: i32, %arg1: memref<1x8x32xf32, #tpu.memory_space<vmem>>, %arg2: memref<1x32xf32, #tpu.memory_space<vmem>>, %arg3: memref<1x32xf32, #tpu.memory_space<vmem>>, %arg4: memref<32x64xbf16, #tpu.memory_space<vmem>>, %arg5: memref<32x64xbf16, #tpu.memory_space<vmem>>, %arg6: memref<32x64xbf16, #tpu.memory_space<vmem>>, %arg7: memref<64x32xbf16, #tpu.memory_space<vmem>>, %arg8: memref<1x32xf32, #tpu.memory_space<vmem>>, %arg9: memref<1x8x32xf32, #tpu.memory_space<vmem>>) attributes {dimension_semantics = [#tpu.dimension_semantics<parallel>], iteration_bounds = array<i64: 2>, scalar_prefetch = 0 : i64, scratch_operands = 0 : i64, tpu.core_type = #tpu.core_type<tc>, window_params = [{transform_indices = @transform_0, window_bounds = array<i64: 1, 8, 32>}, {pipeline_mode = #tpu.pipeline_mode<synchronous>, transform_indices = @transform_1, window_bounds = array<i64: 1, 32>}, {pipeline_mode = #tpu.pipeline_mode<synchronous>, transform_indices = @transform_2, window_bounds = array<i64: 1, 32>}, {pipeline_mode = #tpu.pipeline_mode<synchronous>, transform_indices = @transform_3, window_bounds = array<i64: 32, 64>}, {pipeline_mode = #tpu.pipeline_mode<synchronous>, transform_indices = @transform_4, window_bounds = array<i64: 32, 64>}, {pipeline_mode = #tpu.pipeline_mode<synchronous>, transform_indices = @transform_5, window_bounds = array<i64: 32, 64>}, {pipeline_mode = #tpu.pipeline_mode<synchronous>, transform_indices = @transform_6, window_bounds = array<i64: 64, 32>}, {pipeline_mode = #tpu.pipeline_mode<synchronous>, transform_indices = @transform_7, window_bounds = array<i64: 1, 32>}, {transform_indices = @transform_8, window_bounds = array<i64: 1, 8, 32>}]} {
    %c0 = arith.constant 0 : index
    %c0_0 = arith.constant 0 : index
    %c0_1 = arith.constant 0 : index
    %0 = vector.load %arg1[%c0, %c0_0, %c0_1] : memref<1x8x32xf32, #tpu.memory_space<vmem>>, vector<1x8x32xf32>
    %1 = vector.shape_cast %0 : vector<1x8x32xf32> to vector<8x32xf32>
    %cst = arith.constant dense<0.000000e+00> : vector<8xf32>
    %2 = vector.multi_reduction <add>, %1, %cst [1] : vector<8x32xf32> to vector<8xf32>
    %3 = vector.shape_cast %2 : vector<8xf32> to vector<8x1xf32>
    %cst_2 = arith.constant 3.200000e+01 : f32
    %4 = vector.broadcast %cst_2 : f32 to vector<8x1xf32>
    %5 = arith.divf %3, %4 : vector<8x1xf32>
    %6 = vector.broadcast %5 : vector<8x1xf32> to vector<8x32xf32>
    %7 = arith.subf %1, %6 : vector<8x32xf32>
    %8 = arith.mulf %7, %7 : vector<8x32xf32>
    %cst_3 = arith.constant dense<0.000000e+00> : vector<8xf32>
    %9 = vector.multi_reduction <add>, %8, %cst_3 [1] : vector<8x32xf32> to vector<8xf32>
    %10 = vector.shape_cast %9 : vector<8xf32> to vector<8x1xf32>
    %cst_4 = arith.constant 3.200000e+01 : f32
    %11 = vector.broadcast %cst_4 : f32 to vector<8x1xf32>
    %12 = arith.divf %10, %11 : vector<8x1xf32>
    %cst_5 = arith.constant 9.99999974E-6 : f32
    %13 = vector.broadcast %cst_5 : f32 to vector<8x1xf32>
    %14 = arith.addf %12, %13 : vector<8x1xf32>
    %15 = math.rsqrt %14 : vector<8x1xf32>
    %16 = vector.broadcast %15 : vector<8x1xf32> to vector<8x32xf32>
    %17 = arith.mulf %7, %16 : vector<8x32xf32>
    %c0_6 = arith.constant 0 : index
    %c0_7 = arith.constant 0 : index
    %18 = vector.load %arg2[%c0_6, %c0_7] : memref<1x32xf32, #tpu.memory_space<vmem>>, vector<1x32xf32>
    %19 = vector.shape_cast %18 : vector<1x32xf32> to vector<32xf32>
    %20 = vector.shape_cast %19 : vector<32xf32> to vector<1x32xf32>
    %21 = vector.broadcast %20 : vector<1x32xf32> to vector<8x32xf32>
    %22 = arith.mulf %17, %21 : vector<8x32xf32>
    %c0_8 = arith.constant 0 : index
    %c0_9 = arith.constant 0 : index
    %23 = vector.load %arg3[%c0_8, %c0_9] : memref<1x32xf32, #tpu.memory_space<vmem>>, vector<1x32xf32>
    %24 = vector.shape_cast %23 : vector<1x32xf32> to vector<32xf32>
    %25 = vector.shape_cast %24 : vector<32xf32> to vector<1x32xf32>
    %26 = vector.broadcast %25 : vector<1x32xf32> to vector<8x32xf32>
    %27 = arith.addf %22, %26 : vector<8x32xf32>
    %28 = arith.truncf %27 : vector<8x32xf32> to vector<8x32xbf16>
    %c0_10 = arith.constant 0 : index
    %c0_11 = arith.constant 0 : index
    %29 = vector.load %arg4[%c0_10, %c0_11] : memref<32x64xbf16, #tpu.memory_space<vmem>>, vector<32x64xbf16>
    %cst_12 = arith.constant dense<0.000000e+00> : vector<8x64xf32>
    %30 = tpu.matmul %28, %29, %cst_12 {dimension_numbers = #tpu.dot_dimension_numbers<[1], [0], [0], [1], [0, 0, 1, 1], [], []>} : vector<8x32xbf16>, vector<32x64xbf16>, vector<8x64xf32> -> vector<8x64xf32>
    %31 = arith.truncf %30 : vector<8x64xf32> to vector<8x64xbf16>
    %c0_13 = arith.constant 0 : index
    %c0_14 = arith.constant 0 : index
    %32 = vector.load %arg5[%c0_13, %c0_14] : memref<32x64xbf16, #tpu.memory_space<vmem>>, vector<32x64xbf16>
    %cst_15 = arith.constant dense<0.000000e+00> : vector<8x64xf32>
    %33 = tpu.matmul %28, %32, %cst_15 {dimension_numbers = #tpu.dot_dimension_numbers<[1], [0], [0], [1], [0, 0, 1, 1], [], []>} : vector<8x32xbf16>, vector<32x64xbf16>, vector<8x64xf32> -> vector<8x64xf32>
    %34 = arith.truncf %33 : vector<8x64xf32> to vector<8x64xbf16>
    %c0_16 = arith.constant 0 : index
    %c0_17 = arith.constant 0 : index
    %35 = vector.load %arg6[%c0_16, %c0_17] : memref<32x64xbf16, #tpu.memory_space<vmem>>, vector<32x64xbf16>
    %cst_18 = arith.constant dense<0.000000e+00> : vector<8x64xf32>
    %36 = tpu.matmul %28, %35, %cst_18 {dimension_numbers = #tpu.dot_dimension_numbers<[1], [0], [0], [1], [0, 0, 1, 1], [], []>} : vector<8x32xbf16>, vector<32x64xbf16>, vector<8x64xf32> -> vector<8x64xf32>
    %37 = arith.truncf %36 : vector<8x64xf32> to vector<8x64xbf16>
    %cst_19 = arith.constant 0.000000e+00 : f32
    %38 = vector.broadcast %cst_19 : f32 to vector<8x32xf32>
    %39 = vector.extract_strided_slice %31 {offsets = [0, 0], sizes = [8, 16], strides = [1, 1]} : vector<8x64xbf16> to vector<8x16xbf16>
    %40 = vector.shape_cast %39 : vector<8x16xbf16> to vector<1x8x16xbf16>
    %41 = vector.extract_strided_slice %34 {offsets = [0, 0], sizes = [8, 16], strides = [1, 1]} : vector<8x64xbf16> to vector<8x16xbf16>
    %42 = vector.shape_cast %41 : vector<8x16xbf16> to vector<1x8x16xbf16>
    %43 = vector.extract_strided_slice %37 {offsets = [0, 0], sizes = [8, 16], strides = [1, 1]} : vector<8x64xbf16> to vector<8x16xbf16>
    %44 = vector.shape_cast %43 : vector<8x16xbf16> to vector<1x8x16xbf16>
    %cst_20 = arith.constant 0xFF800000 : f32
    %45 = vector.broadcast %cst_20 : f32 to vector<1x8x1xf32>
    %cst_21 = arith.constant 0.000000e+00 : f32
    %46 = vector.broadcast %cst_21 : f32 to vector<1x8x1xf32>
    %cst_22 = arith.constant 0.000000e+00 : f32
    %47 = vector.broadcast %cst_22 : f32 to vector<1x8x16xf32>
    "tpu.trace_start"() <{level = 10 : i32, message = "bqd,bkd->bqk"}> : () -> ()
    %cst_23 = arith.constant dense<0.000000e+00> : vector<1x8x8xf32>
    %48 = tpu.matmul %40, %42, %cst_23 {dimension_numbers = #tpu.dot_dimension_numbers<[2], [2], [1], [1], [0, 0, 0, 1, 1, 1], [0], [0]>} : vector<1x8x16xbf16>, vector<1x8x16xbf16>, vector<1x8x8xf32> -> vector<1x8x8xf32>
    "tpu.trace_stop"() : () -> ()
    %cst_24 = arith.constant dense<0xFF800000> : vector<1x8xf32>
    %49 = vector.multi_reduction <maximumf>, %48, %cst_24 [2] : vector<1x8x8xf32> to vector<1x8xf32>
    %50 = vector.shape_cast %49 : vector<1x8xf32> to vector<1x8x1xf32>
    %51 = arith.maximumf %45, %50 : vector<1x8x1xf32>
    %52 = arith.subf %45, %51 : vector<1x8x1xf32>
    %53 = math.exp %52 : vector<1x8x1xf32>
    %54 = vector.broadcast %51 : vector<1x8x1xf32> to vector<1x8x8xf32>
    %55 = arith.subf %48, %54 : vector<1x8x8xf32>
    %56 = arith.truncf %55 : vector<1x8x8xf32> to vector<1x8x8xbf16>
    %57 = math.exp %56 : vector<1x8x8xbf16>
    %58 = arith.mulf %53, %46 : vector<1x8x1xf32>
    %59 = arith.extf %57 : vector<1x8x8xbf16> to vector<1x8x8xf32>
    %cst_25 = arith.constant dense<0.000000e+00> : vector<1x8xf32>
    %60 = vector.multi_reduction <add>, %59, %cst_25 [2] : vector<1x8x8xf32> to vector<1x8xf32>
    %61 = vector.shape_cast %60 : vector<1x8xf32> to vector<1x8x1xf32>
    %62 = arith.addf %58, %61 : vector<1x8x1xf32>
    %63 = vector.broadcast %53 : vector<1x8x1xf32> to vector<1x8x16xf32>
    %64 = arith.mulf %63, %47 : vector<1x8x16xf32>
    "tpu.trace_start"() <{level = 10 : i32, message = "bqk,bkd->bqd"}> : () -> ()
    %cst_26 = arith.constant dense<0.000000e+00> : vector<1x8x16xf32>
    %65 = tpu.matmul %57, %44, %cst_26 {dimension_numbers = #tpu.dot_dimension_numbers<[2], [1], [1], [2], [0, 0, 0, 1, 1, 2], [0], [0]>} : vector<1x8x8xbf16>, vector<1x8x16xbf16>, vector<1x8x16xf32> -> vector<1x8x16xf32>
    "tpu.trace_stop"() : () -> ()
    %66 = arith.addf %64, %65 : vector<1x8x16xf32>
    %67 = tpu.reciprocal %62 {approx = true} : vector<1x8x1xf32> -> vector<1x8x1xf32>
    %68 = vector.broadcast %67 : vector<1x8x1xf32> to vector<1x8x16xf32>
    %69 = arith.mulf %66, %68 : vector<1x8x16xf32>
    %70 = vector.shape_cast %69 : vector<1x8x16xf32> to vector<8x16xf32>
    %71 = arith.truncf %70 : vector<8x16xf32> to vector<8x16xbf16>
    %c0_27 = arith.constant 0 : index
    %c0_28 = arith.constant 0 : index
    %72 = vector.load %arg7[%c0_27, %c0_28] : memref<64x32xbf16, #tpu.memory_space<vmem>>, vector<16x32xbf16>
    %cst_29 = arith.constant dense<0.000000e+00> : vector<8x32xf32>
    %73 = tpu.matmul %71, %72, %cst_29 {dimension_numbers = #tpu.dot_dimension_numbers<[1], [0], [0], [1], [0, 0, 1, 1], [], []>} : vector<8x16xbf16>, vector<16x32xbf16>, vector<8x32xf32> -> vector<8x32xf32>
    %74 = arith.addf %38, %73 : vector<8x32xf32>
    %75 = vector.extract_strided_slice %31 {offsets = [0, 16], sizes = [8, 16], strides = [1, 1]} : vector<8x64xbf16> to vector<8x16xbf16>
    %76 = vector.shape_cast %75 : vector<8x16xbf16> to vector<1x8x16xbf16>
    %77 = vector.extract_strided_slice %34 {offsets = [0, 16], sizes = [8, 16], strides = [1, 1]} : vector<8x64xbf16> to vector<8x16xbf16>
    %78 = vector.shape_cast %77 : vector<8x16xbf16> to vector<1x8x16xbf16>
    %79 = vector.extract_strided_slice %37 {offsets = [0, 16], sizes = [8, 16], strides = [1, 1]} : vector<8x64xbf16> to vector<8x16xbf16>
    %80 = vector.shape_cast %79 : vector<8x16xbf16> to vector<1x8x16xbf16>
    %cst_30 = arith.constant 0xFF800000 : f32
    %81 = vector.broadcast %cst_30 : f32 to vector<1x8x1xf32>
    %cst_31 = arith.constant 0.000000e+00 : f32
    %82 = vector.broadcast %cst_31 : f32 to vector<1x8x1xf32>
    %cst_32 = arith.constant 0.000000e+00 : f32
    %83 = vector.broadcast %cst_32 : f32 to vector<1x8x16xf32>
    "tpu.trace_start"() <{level = 10 : i32, message = "bqd,bkd->bqk"}> : () -> ()
    %cst_33 = arith.constant dense<0.000000e+00> : vector<1x8x8xf32>
    %84 = tpu.matmul %76, %78, %cst_33 {dimension_numbers = #tpu.dot_dimension_numbers<[2], [2], [1], [1], [0, 0, 0, 1, 1, 1], [0], [0]>} : vector<1x8x16xbf16>, vector<1x8x16xbf16>, vector<1x8x8xf32> -> vector<1x8x8xf32>
    "tpu.trace_stop"() : () -> ()
    %cst_34 = arith.constant dense<0xFF800000> : vector<1x8xf32>
    %85 = vector.multi_reduction <maximumf>, %84, %cst_34 [2] : vector<1x8x8xf32> to vector<1x8xf32>
    %86 = vector.shape_cast %85 : vector<1x8xf32> to vector<1x8x1xf32>
    %87 = arith.maximumf %81, %86 : vector<1x8x1xf32>
    %88 = arith.subf %81, %87 : vector<1x8x1xf32>
    %89 = math.exp %88 : vector<1x8x1xf32>
    %90 = vector.broadcast %87 : vector<1x8x1xf32> to vector<1x8x8xf32>
    %91 = arith.subf %84, %90 : vector<1x8x8xf32>
    %92 = arith.truncf %91 : vector<1x8x8xf32> to vector<1x8x8xbf16>
    %93 = math.exp %92 : vector<1x8x8xbf16>
    %94 = arith.mulf %89, %82 : vector<1x8x1xf32>
    %95 = arith.extf %93 : vector<1x8x8xbf16> to vector<1x8x8xf32>
    %cst_35 = arith.constant dense<0.000000e+00> : vector<1x8xf32>
    %96 = vector.multi_reduction <add>, %95, %cst_35 [2] : vector<1x8x8xf32> to vector<1x8xf32>
    %97 = vector.shape_cast %96 : vector<1x8xf32> to vector<1x8x1xf32>
    %98 = arith.addf %94, %97 : vector<1x8x1xf32>
    %99 = vector.broadcast %89 : vector<1x8x1xf32> to vector<1x8x16xf32>
    %100 = arith.mulf %99, %83 : vector<1x8x16xf32>
    "tpu.trace_start"() <{level = 10 : i32, message = "bqk,bkd->bqd"}> : () -> ()
    %cst_36 = arith.constant dense<0.000000e+00> : vector<1x8x16xf32>
    %101 = tpu.matmul %93, %80, %cst_36 {dimension_numbers = #tpu.dot_dimension_numbers<[2], [1], [1], [2], [0, 0, 0, 1, 1, 2], [0], [0]>} : vector<1x8x8xbf16>, vector<1x8x16xbf16>, vector<1x8x16xf32> -> vector<1x8x16xf32>
    "tpu.trace_stop"() : () -> ()
    %102 = arith.addf %100, %101 : vector<1x8x16xf32>
    %103 = tpu.reciprocal %98 {approx = true} : vector<1x8x1xf32> -> vector<1x8x1xf32>
    %104 = vector.broadcast %103 : vector<1x8x1xf32> to vector<1x8x16xf32>
    %105 = arith.mulf %102, %104 : vector<1x8x16xf32>
    %106 = vector.shape_cast %105 : vector<1x8x16xf32> to vector<8x16xf32>
    %107 = arith.truncf %106 : vector<8x16xf32> to vector<8x16xbf16>
    %c16 = arith.constant 16 : index
    %c0_37 = arith.constant 0 : index
    %108 = vector.load %arg7[%c16, %c0_37] : memref<64x32xbf16, #tpu.memory_space<vmem>>, vector<16x32xbf16>
    %cst_38 = arith.constant dense<0.000000e+00> : vector<8x32xf32>
    %109 = tpu.matmul %107, %108, %cst_38 {dimension_numbers = #tpu.dot_dimension_numbers<[1], [0], [0], [1], [0, 0, 1, 1], [], []>} : vector<8x16xbf16>, vector<16x32xbf16>, vector<8x32xf32> -> vector<8x32xf32>
    %110 = arith.addf %74, %109 : vector<8x32xf32>
    %111 = vector.extract_strided_slice %31 {offsets = [0, 32], sizes = [8, 16], strides = [1, 1]} : vector<8x64xbf16> to vector<8x16xbf16>
    %112 = vector.shape_cast %111 : vector<8x16xbf16> to vector<1x8x16xbf16>
    %113 = vector.extract_strided_slice %34 {offsets = [0, 32], sizes = [8, 16], strides = [1, 1]} : vector<8x64xbf16> to vector<8x16xbf16>
    %114 = vector.shape_cast %113 : vector<8x16xbf16> to vector<1x8x16xbf16>
    %115 = vector.extract_strided_slice %37 {offsets = [0, 32], sizes = [8, 16], strides = [1, 1]} : vector<8x64xbf16> to vector<8x16xbf16>
    %116 = vector.shape_cast %115 : vector<8x16xbf16> to vector<1x8x16xbf16>
    %cst_39 = arith.constant 0xFF800000 : f32
    %117 = vector.broadcast %cst_39 : f32 to vector<1x8x1xf32>
    %cst_40 = arith.constant 0.000000e+00 : f32
    %118 = vector.broadcast %cst_40 : f32 to vector<1x8x1xf32>
    %cst_41 = arith.constant 0.000000e+00 : f32
    %119 = vector.broadcast %cst_41 : f32 to vector<1x8x16xf32>
    "tpu.trace_start"() <{level = 10 : i32, message = "bqd,bkd->bqk"}> : () -> ()
    %cst_42 = arith.constant dense<0.000000e+00> : vector<1x8x8xf32>
    %120 = tpu.matmul %112, %114, %cst_42 {dimension_numbers = #tpu.dot_dimension_numbers<[2], [2], [1], [1], [0, 0, 0, 1, 1, 1], [0], [0]>} : vector<1x8x16xbf16>, vector<1x8x16xbf16>, vector<1x8x8xf32> -> vector<1x8x8xf32>
    "tpu.trace_stop"() : () -> ()
    %cst_43 = arith.constant dense<0xFF800000> : vector<1x8xf32>
    %121 = vector.multi_reduction <maximumf>, %120, %cst_43 [2] : vector<1x8x8xf32> to vector<1x8xf32>
    %122 = vector.shape_cast %121 : vector<1x8xf32> to vector<1x8x1xf32>
    %123 = arith.maximumf %117, %122 : vector<1x8x1xf32>
    %124 = arith.subf %117, %123 : vector<1x8x1xf32>
    %125 = math.exp %124 : vector<1x8x1xf32>
    %126 = vector.broadcast %123 : vector<1x8x1xf32> to vector<1x8x8xf32>
    %127 = arith.subf %120, %126 : vector<1x8x8xf32>
    %128 = arith.truncf %127 : vector<1x8x8xf32> to vector<1x8x8xbf16>
    %129 = math.exp %128 : vector<1x8x8xbf16>
    %130 = arith.mulf %125, %118 : vector<1x8x1xf32>
    %131 = arith.extf %129 : vector<1x8x8xbf16> to vector<1x8x8xf32>
    %cst_44 = arith.constant dense<0.000000e+00> : vector<1x8xf32>
    %132 = vector.multi_reduction <add>, %131, %cst_44 [2] : vector<1x8x8xf32> to vector<1x8xf32>
    %133 = vector.shape_cast %132 : vector<1x8xf32> to vector<1x8x1xf32>
    %134 = arith.addf %130, %133 : vector<1x8x1xf32>
    %135 = vector.broadcast %125 : vector<1x8x1xf32> to vector<1x8x16xf32>
    %136 = arith.mulf %135, %119 : vector<1x8x16xf32>
    "tpu.trace_start"() <{level = 10 : i32, message = "bqk,bkd->bqd"}> : () -> ()
    %cst_45 = arith.constant dense<0.000000e+00> : vector<1x8x16xf32>
    %137 = tpu.matmul %129, %116, %cst_45 {dimension_numbers = #tpu.dot_dimension_numbers<[2], [1], [1], [2], [0, 0, 0, 1, 1, 2], [0], [0]>} : vector<1x8x8xbf16>, vector<1x8x16xbf16>, vector<1x8x16xf32> -> vector<1x8x16xf32>
    "tpu.trace_stop"() : () -> ()
    %138 = arith.addf %136, %137 : vector<1x8x16xf32>
    %139 = tpu.reciprocal %134 {approx = true} : vector<1x8x1xf32> -> vector<1x8x1xf32>
    %140 = vector.broadcast %139 : vector<1x8x1xf32> to vector<1x8x16xf32>
    %141 = arith.mulf %138, %140 : vector<1x8x16xf32>
    %142 = vector.shape_cast %141 : vector<1x8x16xf32> to vector<8x16xf32>
    %143 = arith.truncf %142 : vector<8x16xf32> to vector<8x16xbf16>
    %c32 = arith.constant 32 : index
    %c0_46 = arith.constant 0 : index
    %144 = vector.load %arg7[%c32, %c0_46] : memref<64x32xbf16, #tpu.memory_space<vmem>>, vector<16x32xbf16>
    %cst_47 = arith.constant dense<0.000000e+00> : vector<8x32xf32>
    %145 = tpu.matmul %143, %144, %cst_47 {dimension_numbers = #tpu.dot_dimension_numbers<[1], [0], [0], [1], [0, 0, 1, 1], [], []>} : vector<8x16xbf16>, vector<16x32xbf16>, vector<8x32xf32> -> vector<8x32xf32>
    %146 = arith.addf %110, %145 : vector<8x32xf32>
    %147 = vector.extract_strided_slice %31 {offsets = [0, 48], sizes = [8, 16], strides = [1, 1]} : vector<8x64xbf16> to vector<8x16xbf16>
    %148 = vector.shape_cast %147 : vector<8x16xbf16> to vector<1x8x16xbf16>
    %149 = vector.extract_strided_slice %34 {offsets = [0, 48], sizes = [8, 16], strides = [1, 1]} : vector<8x64xbf16> to vector<8x16xbf16>
    %150 = vector.shape_cast %149 : vector<8x16xbf16> to vector<1x8x16xbf16>
    %151 = vector.extract_strided_slice %37 {offsets = [0, 48], sizes = [8, 16], strides = [1, 1]} : vector<8x64xbf16> to vector<8x16xbf16>
    %152 = vector.shape_cast %151 : vector<8x16xbf16> to vector<1x8x16xbf16>
    %cst_48 = arith.constant 0xFF800000 : f32
    %153 = vector.broadcast %cst_48 : f32 to vector<1x8x1xf32>
    %cst_49 = arith.constant 0.000000e+00 : f32
    %154 = vector.broadcast %cst_49 : f32 to vector<1x8x1xf32>
    %cst_50 = arith.constant 0.000000e+00 : f32
    %155 = vector.broadcast %cst_50 : f32 to vector<1x8x16xf32>
    "tpu.trace_start"() <{level = 10 : i32, message = "bqd,bkd->bqk"}> : () -> ()
    %cst_51 = arith.constant dense<0.000000e+00> : vector<1x8x8xf32>
    %156 = tpu.matmul %148, %150, %cst_51 {dimension_numbers = #tpu.dot_dimension_numbers<[2], [2], [1], [1], [0, 0, 0, 1, 1, 1], [0], [0]>} : vector<1x8x16xbf16>, vector<1x8x16xbf16>, vector<1x8x8xf32> -> vector<1x8x8xf32>
    "tpu.trace_stop"() : () -> ()
    %cst_52 = arith.constant dense<0xFF800000> : vector<1x8xf32>
    %157 = vector.multi_reduction <maximumf>, %156, %cst_52 [2] : vector<1x8x8xf32> to vector<1x8xf32>
    %158 = vector.shape_cast %157 : vector<1x8xf32> to vector<1x8x1xf32>
    %159 = arith.maximumf %153, %158 : vector<1x8x1xf32>
    %160 = arith.subf %153, %159 : vector<1x8x1xf32>
    %161 = math.exp %160 : vector<1x8x1xf32>
    %162 = vector.broadcast %159 : vector<1x8x1xf32> to vector<1x8x8xf32>
    %163 = arith.subf %156, %162 : vector<1x8x8xf32>
    %164 = arith.truncf %163 : vector<1x8x8xf32> to vector<1x8x8xbf16>
    %165 = math.exp %164 : vector<1x8x8xbf16>
    %166 = arith.mulf %161, %154 : vector<1x8x1xf32>
    %167 = arith.extf %165 : vector<1x8x8xbf16> to vector<1x8x8xf32>
    %cst_53 = arith.constant dense<0.000000e+00> : vector<1x8xf32>
    %168 = vector.multi_reduction <add>, %167, %cst_53 [2] : vector<1x8x8xf32> to vector<1x8xf32>
    %169 = vector.shape_cast %168 : vector<1x8xf32> to vector<1x8x1xf32>
    %170 = arith.addf %166, %169 : vector<1x8x1xf32>
    %171 = vector.broadcast %161 : vector<1x8x1xf32> to vector<1x8x16xf32>
    %172 = arith.mulf %171, %155 : vector<1x8x16xf32>
    "tpu.trace_start"() <{level = 10 : i32, message = "bqk,bkd->bqd"}> : () -> ()
    %cst_54 = arith.constant dense<0.000000e+00> : vector<1x8x16xf32>
    %173 = tpu.matmul %165, %152, %cst_54 {dimension_numbers = #tpu.dot_dimension_numbers<[2], [1], [1], [2], [0, 0, 0, 1, 1, 2], [0], [0]>} : vector<1x8x8xbf16>, vector<1x8x16xbf16>, vector<1x8x16xf32> -> vector<1x8x16xf32>
    "tpu.trace_stop"() : () -> ()
    %174 = arith.addf %172, %173 : vector<1x8x16xf32>
    %175 = tpu.reciprocal %170 {approx = true} : vector<1x8x1xf32> -> vector<1x8x1xf32>
    %176 = vector.broadcast %175 : vector<1x8x1xf32> to vector<1x8x16xf32>
    %177 = arith.mulf %174, %176 : vector<1x8x16xf32>
    %178 = vector.shape_cast %177 : vector<1x8x16xf32> to vector<8x16xf32>
    %179 = arith.truncf %178 : vector<8x16xf32> to vector<8x16xbf16>
    %c48 = arith.constant 48 : index
    %c0_55 = arith.constant 0 : index
    %180 = vector.load %arg7[%c48, %c0_55] : memref<64x32xbf16, #tpu.memory_space<vmem>>, vector<16x32xbf16>
    %cst_56 = arith.constant dense<0.000000e+00> : vector<8x32xf32>
    %181 = tpu.matmul %179, %180, %cst_56 {dimension_numbers = #tpu.dot_dimension_numbers<[1], [0], [0], [1], [0, 0, 1, 1], [], []>} : vector<8x16xbf16>, vector<16x32xbf16>, vector<8x32xf32> -> vector<8x32xf32>
    %182 = arith.addf %146, %181 : vector<8x32xf32>
    %c0_57 = arith.constant 0 : index
    %c0_58 = arith.constant 0 : index
    %183 = vector.load %arg8[%c0_57, %c0_58] : memref<1x32xf32, #tpu.memory_space<vmem>>, vector<1x32xf32>
    %184 = vector.shape_cast %183 : vector<1x32xf32> to vector<32xf32>
    %185 = vector.shape_cast %184 : vector<32xf32> to vector<1x32xf32>
    %186 = vector.broadcast %185 : vector<1x32xf32> to vector<8x32xf32>
    %187 = arith.addf %182, %186 : vector<8x32xf32>
    %188 = vector.shape_cast %187 : vector<8x32xf32> to vector<1x8x32xf32>
    %c0_59 = arith.constant 0 : index
    %c0_60 = arith.constant 0 : index
    %c0_61 = arith.constant 0 : index
    %189 = vector.load %arg9[%c0_59, %c0_60, %c0_61] : memref<1x8x32xf32, #tpu.memory_space<vmem>>, vector<1x8x32xf32>
    tpu.vector_store %arg9[%c0_59, %c0_60, %c0_61], %188 {strides = array<i32>} : memref<1x8x32xf32, #tpu.memory_space<vmem>>, vector<1x8x32xf32>,
    return
  }
  func.func @transform_0(%arg0: i32) -> (i32, i32, i32) {
    %c0_i32 = arith.constant 0 : i32
    %c0_i32_0 = arith.constant 0 : i32
    %c0_i32_1 = arith.constant 0 : i32
    return %arg0, %c0_i32, %c0_i32_0 : i32, i32, i32
  }
  func.func @transform_1(%arg0: i32) -> (i32, i32) {
    %c0_i32 = arith.constant 0 : i32
    %c0_i32_0 = arith.constant 0 : i32
    %c0_i32_1 = arith.constant 0 : i32
    return %c0_i32, %c0_i32_0 : i32, i32
  }
  func.func @transform_2(%arg0: i32) -> (i32, i32) {
    %c0_i32 = arith.constant 0 : i32
    %c0_i32_0 = arith.constant 0 : i32
    %c0_i32_1 = arith.constant 0 : i32
    return %c0_i32, %c0_i32_0 : i32, i32
  }
  func.func @transform_3(%arg0: i32) -> (i32, i32) {
    %c0_i32 = arith.constant 0 : i32
    %c0_i32_0 = arith.constant 0 : i32
    %c0_i32_1 = arith.constant 0 : i32
    return %c0_i32, %c0_i32_0 : i32, i32
  }
  func.func @transform_4(%arg0: i32) -> (i32, i32) {
    %c0_i32 = arith.constant 0 : i32
    %c0_i32_0 = arith.constant 0 : i32
    %c0_i32_1 = arith.constant 0 : i32
    return %c0_i32, %c0_i32_0 : i32, i32
  }
  func.func @transform_5(%arg0: i32) -> (i32, i32) {
    %c0_i32 = arith.constant 0 : i32
    %c0_i32_0 = arith.constant 0 : i32
    %c0_i32_1 = arith.constant 0 : i32
    return %c0_i32, %c0_i32_0 : i32, i32
  }
  func.func @transform_6(%arg0: i32) -> (i32, i32) {
    %c0_i32 = arith.constant 0 : i32
    %c0_i32_0 = arith.constant 0 : i32
    %c0_i32_1 = arith.constant 0 : i32
    return %c0_i32, %c0_i32_0 : i32, i32
  }
  func.func @transform_7(%arg0: i32) -> (i32, i32) {
    %c0_i32 = arith.constant 0 : i32
    %c0_i32_0 = arith.constant 0 : i32
    %c0_i32_1 = arith.constant 0 : i32
    return %c0_i32, %c0_i32_0 : i32, i32
  }
  func.func @transform_8(%arg0: i32) -> (i32, i32, i32) {
    %c0_i32 = arith.constant 0 : i32
    %c0_i32_0 = arith.constant 0 : i32
    %c0_i32_1 = arith.constant 0 : i32
    return %arg0, %c0_i32, %c0_i32_0 : i32, i32, i32
  }
}

</mosaic_0001>

<llo_original>
// kernel: tpu_custom_call.1
$region0: #{tpu_custom_call.1}
  #allocation0 [shape = 'u32[]', space=smem, size = 0x4, offset = 0x4, fixed_abs, tag = 'smem constant byte address 0x4 - core index']
  #allocation1 [shape = 'u32[144,128]{1,0:T(1,128)}', space=vmem, size = 0x12000, scoped, tag = 'internal scratch']
  %s0 = inlined_call_operand.vmem [shape: f32[2,8,32], index: 0, kind: input, shape index: {}]
  %s1 = inlined_call_operand.vmem [shape: f32[1,32], index: 1, kind: input, shape index: {}]
  %s2 = inlined_call_operand.vmem [shape: f32[1,32], index: 2, kind: input, shape index: {}]
  %s3 = inlined_call_operand.vmem [shape: bf16[32,64], index: 3, kind: input, shape index: {}]
  %s4 = inlined_call_operand.vmem [shape: bf16[32,64], index: 4, kind: input, shape index: {}]
  %s5 = inlined_call_operand.hbm [shape: bf16[32,64], index: 5, kind: input, shape index: {}]
  %s6 = inlined_call_operand.vmem [shape: bf16[64,32], index: 6, kind: input, shape index: {}]
  %s7 = inlined_call_operand.vmem [shape: f32[1,32], index: 7, kind: input, shape index: {}]
  %s8 = inlined_call_operand.hbm [shape: f32[2,8,32], index: 8, kind: output, shape index: {}]
  %s9 = sld [smem:[#allocation0]]
  $region69: #{tpu_custom_call.1} parent=0
    _
  %s11 = ssub.s32 1, %s9
  %s12 = scalar_select 0, %s11, %s9
  $region1: #{tpu_custom_call.1} parent=0
    #allocation2 [shape = 'u8[8192]{0}', space=vmem, size = 0x2000, scoped, tag = 'input window, operand 5, single buffered']
    #allocation3 [shape = 's32[2]{0}', space=sflag, size = 0x8, scoped, tag = 'scoped memory for tpu_custom_call.1']
    #allocation4 [shape = 's32[2]{0}', space=sflag, size = 0x8, scoped, tag = 'scoped memory for tpu_custom_call.1']
    #allocation5 [shape = 'u8[8192]{0}', space=vmem, size = 0x2000, scoped, tag = 'output window, operand 0']
    %13 = vsyncpa [#allocation3], 0
    %14 = vsyncpa [#allocation4], 0
    %s15 = scalar_lea.sflag [#allocation4], 1
    %16 = vsyncpa %s15, 0
    loop: start=0, step=1, limit=4
    $region2: #{tpu_custom_call.1} parent=1 // loop_pre_header
      _
    $region3: #{tpu_custom_call.1} parent=1 // loop_header
      %s18 = sphi 0, %s22
      %p19 = scmp.ge.s32.totalorder %s18, 4
      %s28 = sphi 0, %s30
      %s31 = sphi 0, %s28
      %s32 = sphi 0, %s31
      %s48 = sphi 0, %s32
      %s52 = sphi 0, %s52
      %s54 = sphi 0, %s52
      %s55 = sphi 0, %s54
      %s69 = sphi 0, %s55
      %s73 = sphi 0, %s73
      %s75 = sphi 0, %s73
      %s76 = sphi 0, %s75
      %s90 = sphi 0, %s76
      %s94 = sphi 0, %s94
      %s96 = sphi 0, %s94
      %s97 = sphi 0, %s96
      %s111 = sphi 0, %s97
      %s115 = sphi 0, %s115
      %s117 = sphi 0, %s115
      %s118 = sphi 0, %s117
      %s132 = sphi 0, %s118
      %s136 = sphi 0, %s136
      %s138 = sphi 0, %s136
      %s139 = sphi 0, %s138
      %s153 = sphi 0, %s139
      %s157 = sphi 0, %s157
      %s159 = sphi 0, %s157
      %s160 = sphi 0, %s159
      %s174 = sphi 0, %s160
      %s178 = sphi 0, %s178
      %s180 = sphi 0, %s178
      %s181 = sphi 0, %s180
      %s195 = sphi 0, %s181
      %s201 = sphi 0, %s203
      %s204 = sphi 0, %s201
      %s205 = sphi 0, %s204
      %s221 = sphi 0, %s205
    $region4: #{tpu_custom_call.1} parent=1 // loop_header_branch
      %21 = sbr.rel (%p19) target = $region8
    $region5: #{tpu_custom_call.1} parent=1 // loop_body
      %s23 = ssub.s32 %s18, 1
      %s24 = ssub.s32 %s18, 2
      %s25 = sadd.s32 %s18, 1
      %s26 = ssub.s32 %s18, %s25
      %p27 = scmp.eq.s32.totalorder %s26, 0
      %s29 = sadd.s32 %s28, 1
      %s30 = scalar_select %p27, %s28, %s29
      %p33 = pneg %p27
      %p34 = scmp.eq.s32.totalorder %s18, 1
      %p35 = por %p33, %p34
      %p36 = scmp.ne.s32.totalorder %s28, %s31
      %p37 = scmp.eq.s32.totalorder %s18, 0
      %p38 = por %p36, %p37
      %p39 = scmp.ne.s32.totalorder %s28, %s31
      %p40 = scmp.eq.s32.totalorder %s23, 1
      %p41 = por %p39, %p40
      %p42 = scmp.ne.s32.totalorder %s31, %s32
      %p43 = scmp.eq.s32.totalorder %s23, 0
      %p44 = por %p42, %p43
      %p45 = scmp.ne.s32.totalorder %s31, %s32
      %p46 = scmp.eq.s32.totalorder %s24, 1
      %p47 = por %p45, %p46
      %p49 = scmp.ne.s32.totalorder %s32, %s48
      %p50 = scmp.eq.s32.totalorder %s24, 0
      %p51 = por %p49, %p50
      %s53 = sadd.s32 %s52, 1
      %p56 = scmp.eq.s32.totalorder %s18, 1
      %p57 = scmp.ne.s32.totalorder %s52, %s54
      %p58 = scmp.eq.s32.totalorder %s18, 0
      %p59 = por %p57, %p58
      %p60 = scmp.ne.s32.totalorder %s52, %s54
      %p61 = scmp.eq.s32.totalorder %s23, 1
      %p62 = por %p60, %p61
      %p63 = scmp.ne.s32.totalorder %s54, %s55
      %p64 = scmp.eq.s32.totalorder %s23, 0
      %p65 = por %p63, %p64
      %p66 = scmp.ne.s32.totalorder %s54, %s55
      %p67 = scmp.eq.s32.totalorder %s24, 1
      %p68 = por %p66, %p67
      %p70 = scmp.ne.s32.totalorder %s55, %s69
      %p71 = scmp.eq.s32.totalorder %s24, 0
      %p72 = por %p70, %p71
      %s74 = sadd.s32 %s73, 1
      %p77 = scmp.eq.s32.totalorder %s18, 1
      %p78 = scmp.ne.s32.totalorder %s73, %s75
      %p79 = scmp.eq.s32.totalorder %s18, 0
      %p80 = por %p78, %p79
      %p81 = scmp.ne.s32.totalorder %s73, %s75
      %p82 = scmp.eq.s32.totalorder %s23, 1
      %p83 = por %p81, %p82
      %p84 = scmp.ne.s32.totalorder %s75, %s76
      %p85 = scmp.eq.s32.totalorder %s23, 0
      %p86 = por %p84, %p85
      %p87 = scmp.ne.s32.totalorder %s75, %s76
      %p88 = scmp.eq.s32.totalorder %s24, 1
      %p89 = por %p87, %p88
      %p91 = scmp.ne.s32.totalorder %s76, %s90
      %p92 = scmp.eq.s32.totalorder %s24, 0
      %p93 = por %p91, %p92
      %s95 = sadd.s32 %s94, 1
      %p98 = scmp.eq.s32.totalorder %s18, 1
      %p99 = scmp.ne.s32.totalorder %s94, %s96
      %p100 = scmp.eq.s32.totalorder %s18, 0
      %p101 = por %p99, %p100
      %p102 = scmp.ne.s32.totalorder %s94, %s96
      %p103 = scmp.eq.s32.totalorder %s23, 1
      %p104 = por %p102, %p103
      %p105 = scmp.ne.s32.totalorder %s96, %s97
      %p106 = scmp.eq.s32.totalorder %s23, 0
      %p107 = por %p105, %p106
      %p108 = scmp.ne.s32.totalorder %s96, %s97
      %p109 = scmp.eq.s32.totalorder %s24, 1
      %p110 = por %p108, %p109
      %p112 = scmp.ne.s32.totalorder %s97, %s111
      %p113 = scmp.eq.s32.totalorder %s24, 0
      %p114 = por %p112, %p113
      %s116 = sadd.s32 %s115, 1
      %p119 = scmp.eq.s32.totalorder %s18, 1
      %p120 = scmp.ne.s32.totalorder %s115, %s117
      %p121 = scmp.eq.s32.totalorder %s18, 0
      %p122 = por %p120, %p121
      %p123 = scmp.ne.s32.totalorder %s115, %s117
      %p124 = scmp.eq.s32.totalorder %s23, 1
      %p125 = por %p123, %p124
      %p126 = scmp.ne.s32.totalorder %s117, %s118
      %p127 = scmp.eq.s32.totalorder %s23, 0
      %p128 = por %p126, %p127
      %p129 = scmp.ne.s32.totalorder %s117, %s118
      %p130 = scmp.eq.s32.totalorder %s24, 1
      %p131 = por %p129, %p130
      %p133 = scmp.ne.s32.totalorder %s118, %s132
      %p134 = scmp.eq.s32.totalorder %s24, 0
      %p135 = por %p133, %p134
      %s137 = sadd.s32 %s136, 1
      %p140 = scmp.eq.s32.totalorder %s18, 1
      %p141 = scmp.ne.s32.totalorder %s136, %s138
      %p142 = scmp.eq.s32.totalorder %s18, 0
      %p143 = por %p141, %p142
      %p144 = scmp.ne.s32.totalorder %s136, %s138
      %p145 = scmp.eq.s32.totalorder %s23, 1
      %p146 = por %p144, %p145
      %p147 = scmp.ne.s32.totalorder %s138, %s139
      %p148 = scmp.eq.s32.totalorder %s23, 0
      %p149 = por %p147, %p148
      %p150 = scmp.ne.s32.totalorder %s138, %s139
      %p151 = scmp.eq.s32.totalorder %s24, 1
      %p152 = por %p150, %p151
      %p154 = scmp.ne.s32.totalorder %s139, %s153
      %p155 = scmp.eq.s32.totalorder %s24, 0
      %p156 = por %p154, %p155
      %s158 = sadd.s32 %s157, 1
      %p161 = scmp.eq.s32.totalorder %s18, 1
      %p162 = scmp.ne.s32.totalorder %s157, %s159
      %p163 = scmp.eq.s32.totalorder %s18, 0
      %p164 = por %p162, %p163
      %p165 = scmp.ne.s32.totalorder %s157, %s159
      %p166 = scmp.eq.s32.totalorder %s23, 1
      %p167 = por %p165, %p166
      %p168 = scmp.ne.s32.totalorder %s159, %s160
      %p169 = scmp.eq.s32.totalorder %s23, 0
      %p170 = por %p168, %p169
      %p171 = scmp.ne.s32.totalorder %s159, %s160
      %p172 = scmp.eq.s32.totalorder %s24, 1
      %p173 = por %p171, %p172
      %p175 = scmp.ne.s32.totalorder %s160, %s174
      %p176 = scmp.eq.s32.totalorder %s24, 0
      %p177 = por %p175, %p176
      %s179 = sadd.s32 %s178, 1
      %p182 = scmp.eq.s32.totalorder %s18, 1
      %p183 = scmp.ne.s32.totalorder %s178, %s180
      %p184 = scmp.eq.s32.totalorder %s18, 0
      %p185 = por %p183, %p184
      %p186 = scmp.ne.s32.totalorder %s178, %s180
      %p187 = scmp.eq.s32.totalorder %s23, 1
      %p188 = por %p186, %p187
      %p189 = scmp.ne.s32.totalorder %s180, %s181
      %p190 = scmp.eq.s32.totalorder %s23, 0
      %p191 = por %p189, %p190
      %p192 = scmp.ne.s32.totalorder %s180, %s181
      %p193 = scmp.eq.s32.totalorder %s24, 1
      %p194 = por %p192, %p193
      %p196 = scmp.ne.s32.totalorder %s181, %s195
      %p197 = scmp.eq.s32.totalorder %s24, 0
      %p198 = por %p196, %p197
      %s199 = ssub.s32 %s18, %s25
      %p200 = scmp.eq.s32.totalorder %s199, 0
      %s202 = sadd.s32 %s201, 1
      %s203 = scalar_select %p200, %s201, %s202
      %p206 = pneg %p200
      %p207 = scmp.eq.s32.totalorder %s18, 1
      %p208 = por %p206, %p207
      %p209 = scmp.ne.s32.totalorder %s201, %s204
      %p210 = scmp.eq.s32.totalorder %s18, 0
      %p211 = por %p209, %p210
      %p212 = scmp.ne.s32.totalorder %s201, %s204
      %p213 = scmp.eq.s32.totalorder %s23, 1
      %p214 = por %p212, %p213
      %p215 = scmp.ne.s32.totalorder %s204, %s205
      %p216 = scmp.eq.s32.totalorder %s23, 0
      %p217 = por %p215, %p216
      %p218 = scmp.ne.s32.totalorder %s204, %s205
      %p219 = scmp.eq.s32.totalorder %s24, 1
      %p220 = por %p218, %p219
      %p222 = scmp.ne.s32.totalorder %s205, %s221
      %p223 = scmp.eq.s32.totalorder %s24, 0
      %p224 = por %p222, %p223
      %p225 = scmp.le.s32.totalorder 1, %s18
      %p226 = scmp.lt.s32.totalorder %s18, 3
      %p227 = pnand %p225, %p226
      %p228 = pneg %p227
      // Predicated region
      $region9: #{tpu_custom_call.1} parent=5 // pred_check
        _
      $region10: #{tpu_custom_call.1} parent=5 // pred_check_branch
        %230 = sbr.rel (%p227) target = $region12
      $region11: #{tpu_custom_call.1} parent=5 // pred_region
        %s231 = ssub.s32 %s18, 1
        // Predicated region
        $region13: #{tpu_custom_call.1} parent=11 // pred_check
          %p232 = pneg %p65
        $region14: #{tpu_custom_call.1} parent=11 // pred_check_branch
          %234 = sbr.rel (%p232) target = $region16
        $region15: #{tpu_custom_call.1} parent=11 // pred_region
          _
        $region16: #{tpu_custom_call.1} parent=11 // pred_fallthru
          _
        // Predicated region
        $region17: #{tpu_custom_call.1} parent=11 // pred_check
          %p235 = pneg %p86
        $region18: #{tpu_custom_call.1} parent=11 // pred_check_branch
          %237 = sbr.rel (%p235) target = $region20
        $region19: #{tpu_custom_call.1} parent=11 // pred_region
          _
        $region20: #{tpu_custom_call.1} parent=11 // pred_fallthru
          _
        // Predicated region
        $region21: #{tpu_custom_call.1} parent=11 // pred_check
          %p238 = pneg %p107
        $region22: #{tpu_custom_call.1} parent=11 // pred_check_branch
          %240 = sbr.rel (%p238) target = $region24
        $region23: #{tpu_custom_call.1} parent=11 // pred_region
          _
        $region24: #{tpu_custom_call.1} parent=11 // pred_fallthru
          _
        // Predicated region
        $region25: #{tpu_custom_call.1} parent=11 // pred_check
          %p241 = pneg %p128
        $region26: #{tpu_custom_call.1} parent=11 // pred_check_branch
          %243 = sbr.rel (%p241) target = $region28
        $region27: #{tpu_custom_call.1} parent=11 // pred_region
          _
        $region28: #{tpu_custom_call.1} parent=11 // pred_fallthru
          _
        // Predicated region
        $region29: #{tpu_custom_call.1} parent=11 // pred_check
          %p244 = pneg %p149
        $region30: #{tpu_custom_call.1} parent=11 // pred_check_branch
          %246 = sbr.rel (%p244) target = $region32
        $region31: #{tpu_custom_call.1} parent=11 // pred_region
          %s248 = ssub.s32 256, 256
          %249 = vsyncadd [#allocation3], %s248
          %s250 = sshll.u32 [#allocation2], 4
          %s251 = int_to_ptr.vmem [resolvable:$true] %s250
          %256 = dma.hbm_to_vmem [thread:$0]  %s5, 256, %s251, [#allocation3], 64, 64, 4
        $region32: #{tpu_custom_call.1} parent=11 // pred_fallthru
          _
        // Predicated region
        $region33: #{tpu_custom_call.1} parent=11 // pred_check
          %p257 = pneg %p170
        $region34: #{tpu_custom_call.1} parent=11 // pred_check_branch
          %259 = sbr.rel (%p257) target = $region36
        $region35: #{tpu_custom_call.1} parent=11 // pred_region
          _
        $region36: #{tpu_custom_call.1} parent=11 // pred_fallthru
          _
        // Predicated region
        $region37: #{tpu_custom_call.1} parent=11 // pred_check
          %p260 = pneg %p191
        $region38: #{tpu_custom_call.1} parent=11 // pred_check_branch
          %262 = sbr.rel (%p260) target = $region40
        $region39: #{tpu_custom_call.1} parent=11 // pred_region
          _
        $region40: #{tpu_custom_call.1} parent=11 // pred_fallthru
          _
      $region12: #{tpu_custom_call.1} parent=5 // pred_fallthru
        _
      %p263 = scmp.lt.s32.totalorder %s18, 2
      // Predicated region
      $region41: #{tpu_custom_call.1} parent=5 // pred_check
        %p264 = pneg %p263
      $region42: #{tpu_custom_call.1} parent=5 // pred_check_branch
        %266 = sbr.rel (%p264) target = $region44
      $region43: #{tpu_custom_call.1} parent=5 // pred_region
        // Predicated region
        $region45: #{tpu_custom_call.1} parent=43 // pred_check
          %p267 = pneg %p38
        $region46: #{tpu_custom_call.1} parent=43 // pred_check_branch
          %269 = sbr.rel (%p267) target = $region48
        $region47: #{tpu_custom_call.1} parent=43 // pred_region
          %p270 = scmp.lt.s32.totalorder %s18, 1
          %s271 = scalar_select %p270, %s18, 1
          %s272 = smul.addr %s271, 8
          %s273 = scalar_lea.vmem %s0, %s272
        $region48: #{tpu_custom_call.1} parent=43 // pred_fallthru
          _
      $region44: #{tpu_custom_call.1} parent=5 // pred_fallthru
        _
      %p274 = scmp.le.s32.totalorder 1, %s18
      %p275 = scmp.lt.s32.totalorder %s18, 3
      %p276 = pnand %p274, %p275
      %p277 = pneg %p276
      // Predicated region
      $region49: #{tpu_custom_call.1} parent=5 // pred_check
        _
      $region50: #{tpu_custom_call.1} parent=5 // pred_check_branch
        %279 = sbr.rel (%p276) target = $region52
      $region51: #{tpu_custom_call.1} parent=5 // pred_region
        %s280 = ssub.s32 %s18, 1
        // Predicated region
        $region53: #{tpu_custom_call.1} parent=51 // pred_check
          %p281 = pneg %p149
        $region54: #{tpu_custom_call.1} parent=51 // pred_check_branch
          %283 = sbr.rel (%p281) target = $region56
        $region55: #{tpu_custom_call.1} parent=51 // pred_region
          %284 = dma.done [#allocation3], 256
        $region56: #{tpu_custom_call.1} parent=51 // pred_fallthru
          _
        %p285 = scmp.lt.s32.totalorder %s23, 1
        %s286 = scalar_select %p285, %s23, 1
        %s287 = smul.addr %s286, 8
        %s288 = scalar_lea.vmem %s0, %s287
        %p289 = pneg %p44
        %p290 = pneg %p41
        %p291 = pneg %p65
        %p292 = pneg %p62
        %p293 = pneg %p86
        %p294 = pneg %p83
        %p295 = pneg %p107
        %p296 = pneg %p104
        %p297 = pneg %p128
        %p298 = pneg %p125
        %p299 = pneg %p149
        %p300 = pneg %p146
        %p301 = pneg %p170
        %p302 = pneg %p167
        %p303 = pneg %p191
        %p304 = pneg %p188
        %p305 = pneg %p217
        %p306 = pneg %p214
        %s307 = sand.u32 %s204, 1
        %s308 = scalar_lea.sflag [#allocation4], %s307
        %s309 = sand.u32 %s204, 1
        %s310 = smul.addr %s309, 8
        %s311 = scalar_lea.vmem [#allocation5], %s310
        %p312 = scmp.lt.s32.totalorder %s23, 1
        %s313 = scalar_select %p312, %s23, 1
        %s314 = smul.addr %s313, 8
        %s315 = scalar_lea.vmem %s0, %s314
        %v317 = vld [vmem:[%s315] sm:$0xff]
        %vm318 = vcmask 261120
        %v319 = vsel %vm318, %v317, 0.0
        %320 = vadd.xlane.f32.xlu0 %v319
        %v321 = vpop.xlane.xlu0 %320
        %v322 = vrcp.pop 32.0
        %v323 = vmul.f32 %v321, %v322
        %v324 = vsub.f32 %v317, %v323
        %v325 = vmul.f32 %v324, %v324
        %v326 = vsel %vm318, %v325, 0.0
        %327 = vadd.xlane.f32.xlu0 %v326
        %v328 = vpop.xlane.xlu0 %327
        %v329 = vmul.f32 %v328, %v322
        %v330 = vadd.f32 %v329, 1e-05
        %v331 = vrsqrt.pop %v330
        %v332 = vmul.f32 %v324, %v331
        %v333 = vld [vmem:[%s1] sm:$0x1]
        %v335 = vlaneseq
        %v336 = vshrl.u32 %v335, 7
        %v337 = vsub.s32 0, %v336
        %v338 = vrot.slane %v333, %v337
        %v340 = vmul.f32 %v332, %v338
        %v341 = vld [vmem:[%s2] sm:$0x1]
        %v343 = vlaneseq
        %v344 = vshrl.u32 %v343, 7
        %v345 = vsub.s32 0, %v344
        %v346 = vrot.slane %v341, %v345
        %v348 = vadd.f32 %v340, %v346
        %v349 = vpack.c.bf16 %v348, %v348
        %v350 = vld [vmem:[%s3] sm:$0xf]
        %v351 = vld [vmem:[%s3 + $0x4] sm:$0xf]
        %v352 = vld [vmem:[%s3 + $0x8] sm:$0xf]
        %v353 = vld [vmem:[%s3 + $0xc] sm:$0xf]
        %v358 = vunpack.c.l.b16 %v350
        %v359 = vunpack.c.l.b16 %v351
        %v360 = vunpack.c.l.b16 %v352
        %v361 = vunpack.c.l.b16 %v353
        %v362 = vpack.c.b16 %v359, %v358
        %v363 = vpack.c.b16 %v361, %v360
        %v367 = vsel %vm318, %v349, 0
        %369 = vmatprep.subr.bf16.mxu0 0
        %370 = vmatpush1.bf16.msra.mxu0 0
        %371 = vmatprep.subr.bf16.mxu0 0
        %372 = vmatpush1.bf16.msra.mxu0 0
        %373 = vmatprep.subr.bf16.mxu0 0
        %374 = vmatpush1.bf16.msra.mxu0 0
        %375 = vmatprep.subr.bf16.mxu0 0
        %376 = vmatpush1.bf16.msra.mxu0 0
        %377 = vmatprep.subr.bf16.mxu0 0
        %378 = vmatpush1.bf16.msra.mxu0 0
        %379 = vmatprep.subr.bf16.mxu0 0
        %380 = vmatpush1.bf16.msra.mxu0 0
        %381 = vmatprep.subr.bf16.mxu0 0
        %382 = vmatpush1.bf16.msra.mxu0 %v363
        %383 = vmatprep.subr.bf16.mxu0 0
        %384 = vmatpush1.bf16.msra.mxu0 %v362
        %385 = vmatprep.subr.bf16.mxu0 0
        %386 = vmatpush2.bf16.msra.mxu0 0
        %387 = vmatprep.subr.bf16.mxu0 0
        %388 = vmatpush2.bf16.msra.mxu0 0
        %389 = vmatprep.subr.bf16.mxu0 0
        %390 = vmatpush2.bf16.msra.mxu0 0
        %391 = vmatprep.subr.bf16.mxu0 0
        %392 = vmatpush2.bf16.msra.mxu0 0
        %393 = vmatprep.subr.bf16.mxu0 0
        %394 = vmatpush2.bf16.msra.mxu0 0
        %395 = vmatprep.subr.bf16.mxu0 0
        %396 = vmatpush2.bf16.msra.mxu0 0
        %397 = vmatprep.subr.bf16.mxu0 0
        %398 = vmatpush2.bf16.msra.mxu0 0
        %399 = vmatprep.subr.bf16.mxu0 0
        %400 = vmatpush2.bf16.msra.mxu0 0
        %401 = vmatprep.mubr.bf16.mxu0 0
        %402 = vmatmul.mubr.bf16.gmra.mxu0 %v367
        %v403 = vpop.f32.mrf.mxu0
        %v404 = vadd.f32 0.0, %v403
        %v405 = vpop.f32.mrf.mxu0
        %v406 = vpop.f32.mrf.mxu0
        %v407 = vpop.f32.mrf.mxu0
        %408 = vdwg.mxu0
        %v409 = vpack.c.bf16 %v404, %v404
        %v410 = vld [vmem:[%s4] sm:$0xf]
        %v411 = vld [vmem:[%s4 + $0x4] sm:$0xf]
        %v412 = vld [vmem:[%s4 + $0x8] sm:$0xf]
        %v413 = vld [vmem:[%s4 + $0xc] sm:$0xf]
        %v418 = vunpack.c.l.b16 %v410
        %v419 = vunpack.c.l.b16 %v411
        %v420 = vunpack.c.l.b16 %v412
        %v421 = vunpack.c.l.b16 %v413
        %v422 = vpack.c.b16 %v419, %v418
        %v423 = vpack.c.b16 %v421, %v420
        %426 = vmatprep.subr.bf16.mxu0 0
        %427 = vmatpush1.bf16.msra.mxu0 0
        %428 = vmatprep.subr.bf16.mxu0 0
        %429 = vmatpush1.bf16.msra.mxu0 0
        %430 = vmatprep.subr.bf16.mxu0 0
        %431 = vmatpush1.bf16.msra.mxu0 0
        %432 = vmatprep.subr.bf16.mxu0 0
        %433 = vmatpush1.bf16.msra.mxu0 0
        %434 = vmatprep.subr.bf16.mxu0 0
        %435 = vmatpush1.bf16.msra.mxu0 0
        %436 = vmatprep.subr.bf16.mxu0 0
        %437 = vmatpush1.bf16.msra.mxu0 0
        %438 = vmatprep.subr.bf16.mxu0 0
        %439 = vmatpush1.bf16.msra.mxu0 %v423
        %440 = vmatprep.subr.bf16.mxu0 0
        %441 = vmatpush1.bf16.msra.mxu0 %v422
        %442 = vmatprep.subr.bf16.mxu0 0
        %443 = vmatpush2.bf16.msra.mxu0 0
        %444 = vmatprep.subr.bf16.mxu0 0
        %445 = vmatpush2.bf16.msra.mxu0 0
        %446 = vmatprep.subr.bf16.mxu0 0
        %447 = vmatpush2.bf16.msra.mxu0 0
        %448 = vmatprep.subr.bf16.mxu0 0
        %449 = vmatpush2.bf16.msra.mxu0 0
        %450 = vmatprep.subr.bf16.mxu0 0
        %451 = vmatpush2.bf16.msra.mxu0 0
        %452 = vmatprep.subr.bf16.mxu0 0
        %453 = vmatpush2.bf16.msra.mxu0 0
        %454 = vmatprep.subr.bf16.mxu0 0
        %455 = vmatpush2.bf16.msra.mxu0 0
        %456 = vmatprep.subr.bf16.mxu0 0
        %457 = vmatpush2.bf16.msra.mxu0 0
        %458 = vmatprep.mubr.bf16.mxu0 0
        %459 = vmatmul.mubr.bf16.gmra.mxu0 %v367
        %v460 = vpop.f32.mrf.mxu0
        %v461 = vadd.f32 0.0, %v460
        %v462 = vpop.f32.mrf.mxu0
        %v463 = vpop.f32.mrf.mxu0
        %v464 = vpop.f32.mrf.mxu0
        %465 = vdwg.mxu0
        %v466 = vpack.c.bf16 %v461, %v461
        %v467 = vld [vmem:[#allocation2] sm:$0xf]
        %v468 = vld [vmem:[#allocation2 + $0x4] sm:$0xf]
        %v469 = vld [vmem:[#allocation2 + $0x8] sm:$0xf]
        %v470 = vld [vmem:[#allocation2 + $0xc] sm:$0xf]
        %v475 = vunpack.c.l.b16 %v467
        %v476 = vunpack.c.l.b16 %v468
        %v477 = vunpack.c.l.b16 %v469
        %v478 = vunpack.c.l.b16 %v470
        %v479 = vpack.c.b16 %v476, %v475
        %v480 = vpack.c.b16 %v478, %v477
        %483 = vmatprep.subr.bf16.mxu0 0
        %484 = vmatpush1.bf16.msra.mxu0 0
        %485 = vmatprep.subr.bf16.mxu0 0
        %486 = vmatpush1.bf16.msra.mxu0 0
        %487 = vmatprep.subr.bf16.mxu0 0
        %488 = vmatpush1.bf16.msra.mxu0 0
        %489 = vmatprep.subr.bf16.mxu0 0
        %490 = vmatpush1.bf16.msra.mxu0 0
        %491 = vmatprep.subr.bf16.mxu0 0
        %492 = vmatpush1.bf16.msra.mxu0 0
        %493 = vmatprep.subr.bf16.mxu0 0
        %494 = vmatpush1.bf16.msra.mxu0 0
        %495 = vmatprep.subr.bf16.mxu0 0
        %496 = vmatpush1.bf16.msra.mxu0 %v480
        %497 = vmatprep.subr.bf16.mxu0 0
        %498 = vmatpush1.bf16.msra.mxu0 %v479
        %499 = vmatprep.subr.bf16.mxu0 0
        %500 = vmatpush2.bf16.msra.mxu0 0
        %501 = vmatprep.subr.bf16.mxu0 0
        %502 = vmatpush2.bf16.msra.mxu0 0
        %503 = vmatprep.subr.bf16.mxu0 0
        %504 = vmatpush2.bf16.msra.mxu0 0
        %505 = vmatprep.subr.bf16.mxu0 0
        %506 = vmatpush2.bf16.msra.mxu0 0
        %507 = vmatprep.subr.bf16.mxu0 0
        %508 = vmatpush2.bf16.msra.mxu0 0
        %509 = vmatprep.subr.bf16.mxu0 0
        %510 = vmatpush2.bf16.msra.mxu0 0
        %511 = vmatprep.subr.bf16.mxu0 0
        %512 = vmatpush2.bf16.msra.mxu0 0
        %513 = vmatprep.subr.bf16.mxu0 0
        %514 = vmatpush2.bf16.msra.mxu0 0
        %515 = vmatprep.mubr.bf16.mxu0 0
        %516 = vmatmul.mubr.bf16.gmra.mxu0 %v367
        %v517 = vpop.f32.mrf.mxu0
        %v518 = vadd.f32 0.0, %v517
        %v519 = vpop.f32.mrf.mxu0
        %v520 = vpop.f32.mrf.mxu0
        %v521 = vpop.f32.mrf.mxu0
        %522 = vdwg.mxu0
        %v523 = vpack.c.bf16 %v518, %v518
        %vm524 = vcmask 130048
        %v526 = vsel %vm524, %v409, 0
        %v529 = vsel %vm524, %v466, 0
        %531 = vmatprep.subr.bf16.mxu0 0
        %532 = vmatpush1.bf16.xpose.msra.mxu0 0
        %533 = vmatprep.subr.bf16.mxu0 0
        %534 = vmatpush1.bf16.xpose.msra.mxu0 0
        %535 = vmatprep.subr.bf16.mxu0 0
        %536 = vmatpush1.bf16.xpose.msra.mxu0 0
        %537 = vmatprep.subr.bf16.mxu0 0
        %538 = vmatpush1.bf16.xpose.msra.mxu0 0
        %539 = vmatprep.subr.bf16.mxu0 0
        %540 = vmatpush1.bf16.xpose.msra.mxu0 0
        %541 = vmatprep.subr.bf16.mxu0 0
        %542 = vmatpush1.bf16.xpose.msra.mxu0 0
        %543 = vmatprep.subr.bf16.mxu0 0
        %544 = vmatpush1.bf16.xpose.msra.mxu0 0
        %545 = vmatprep.subr.bf16.mxu0 0
        %546 = vmatpush1.bf16.xpose.msra.mxu0 %v529
        %547 = vmatprep.subr.bf16.mxu0 0
        %548 = vmatpush2.bf16.xpose.msra.mxu0 0
        %549 = vmatprep.subr.bf16.mxu0 0
        %550 = vmatpush2.bf16.xpose.msra.mxu0 0
        %551 = vmatprep.subr.bf16.mxu0 0
        %552 = vmatpush2.bf16.xpose.msra.mxu0 0
        %553 = vmatprep.subr.bf16.mxu0 0
        %554 = vmatpush2.bf16.xpose.msra.mxu0 0
        %555 = vmatprep.subr.bf16.mxu0 0
        %556 = vmatpush2.bf16.xpose.msra.mxu0 0
        %557 = vmatprep.subr.bf16.mxu0 0
        %558 = vmatpush2.bf16.xpose.msra.mxu0 0
        %559 = vmatprep.subr.bf16.mxu0 0
        %560 = vmatpush2.bf16.xpose.msra.mxu0 0
        %561 = vmatprep.subr.bf16.mxu0 0
        %562 = vmatpush2.bf16.xpose.msra.mxu0 0
        %563 = vmatprep.mubr.bf16.mxu0 0
        %564 = vmatmul.mubr.bf16.gmra.mxu0 %v526
        %v565 = vpop.f32.mrf.mxu0
        %v566 = vadd.f32 0.0, %v565
        %v567 = vpop.f32.mrf.mxu0
        %v568 = vpop.f32.mrf.mxu0
        %v569 = vpop.f32.mrf.mxu0
        %570 = vdwg.mxu0
        %vm571 = vcmask 64512
        %v572 = vsel %vm571, %v566, -inf
        %573 = vmax.xlane.f32.xlu0 %v572
        %v574 = vpop.xlane.xlu0 %573
        %v575 = vsub.f32 -inf, %v574
        %v576 = vmul.f32 %v575, 1.442695
        %v577 = vpow.pop %v576
        %v578 = vsub.f32 %v566, %v574
        %v579 = vpack.c.bf16 %v578, %v578
        %v581 = vmul.bf16 %v579, 1069105081
        %v582 = vpow.bf16.pop %v581
        %v583 = vmul.f32 %v577, 0.0
        %v584 = vunpack.c.l.bf16 %v582
        %v585 = vsel %vm571, %v584, 0.0
        %586 = vadd.xlane.f32.xlu0 %v585
        %v587 = vpop.xlane.xlu0 %586
        %v588 = vadd.f32 %v583, %v587
        %v590 = vsel %vm571, %v582, 0
        %vm592 = vcmask 1043456
        %v594 = vsel %vm592, %v523, 0
        %596 = vmatprep.subr.bf16.mxu0 0
        %597 = vmatpush1.bf16.msra.mxu0 0
        %598 = vmatprep.subr.bf16.mxu0 0
        %599 = vmatpush1.bf16.msra.mxu0 0
        %600 = vmatprep.subr.bf16.mxu0 0
        %601 = vmatpush1.bf16.msra.mxu0 0
        %602 = vmatprep.subr.bf16.mxu0 0
        %603 = vmatpush1.bf16.msra.mxu0 0
        %604 = vmatprep.subr.bf16.mxu0 0
        %605 = vmatpush1.bf16.msra.mxu0 0
        %606 = vmatprep.subr.bf16.mxu0 0
        %607 = vmatpush1.bf16.msra.mxu0 0
        %608 = vmatprep.subr.bf16.mxu0 0
        %609 = vmatpush1.bf16.msra.mxu0 0
        %610 = vmatprep.subr.bf16.mxu0 0
        %611 = vmatpush1.bf16.msra.mxu0 %v594
        %612 = vmatprep.subr.bf16.mxu0 0
        %613 = vmatpush2.bf16.msra.mxu0 0
        %614 = vmatprep.subr.bf16.mxu0 0
        %615 = vmatpush2.bf16.msra.mxu0 0
        %616 = vmatprep.subr.bf16.mxu0 0
        %617 = vmatpush2.bf16.msra.mxu0 0
        %618 = vmatprep.subr.bf16.mxu0 0
        %619 = vmatpush2.bf16.msra.mxu0 0
        %620 = vmatprep.subr.bf16.mxu0 0
        %621 = vmatpush2.bf16.msra.mxu0 0
        %622 = vmatprep.subr.bf16.mxu0 0
        %623 = vmatpush2.bf16.msra.mxu0 0
        %624 = vmatprep.subr.bf16.mxu0 0
        %625 = vmatpush2.bf16.msra.mxu0 0
        %626 = vmatprep.subr.bf16.mxu0 0
        %627 = vmatpush2.bf16.msra.mxu0 0
        %628 = vmatprep.mubr.bf16.mxu0 0
        %629 = vmatmul.mubr.bf16.gmra.mxu0 %v590
        %v630 = vpop.f32.mrf.mxu0
        %v631 = vadd.f32 0.0, %v630
        %v632 = vpop.f32.mrf.mxu0
        %v633 = vpop.f32.mrf.mxu0
        %v634 = vpop.f32.mrf.mxu0
        %635 = vdwg.mxu0
        %v636 = vadd.f32 %v583, %v631
        %v637 = vrcp.pop %v588
        %v638 = vmul.f32 %v636, %v637
        %v639 = vpack.c.bf16 %v638, %v638
        %v640 = vld [vmem:[%s6] sm:$0xf]
        %v641 = vld [vmem:[%s6 + $0x4] sm:$0xf]
        %643 = vrot.lane.b32.xlu0 %v409, 112
        %v644 = vpop.permute.xlu0 %643
        %646 = vrot.lane.b32.xlu0 %v466, 112
        %v647 = vpop.permute.xlu0 %646
        %v649 = vsel %vm524, %v644, 0
        %v652 = vsel %vm524, %v647, 0
        %654 = vmatprep.subr.bf16.mxu0 0
        %655 = vmatpush1.bf16.xpose.msra.mxu0 0
        %656 = vmatprep.subr.bf16.mxu0 0
        %657 = vmatpush1.bf16.xpose.msra.mxu0 0
        %658 = vmatprep.subr.bf16.mxu0 0
        %659 = vmatpush1.bf16.xpose.msra.mxu0 0
        %660 = vmatprep.subr.bf16.mxu0 0
        %661 = vmatpush1.bf16.xpose.msra.mxu0 0
        %662 = vmatprep.subr.bf16.mxu0 0
        %663 = vmatpush1.bf16.xpose.msra.mxu0 0
        %664 = vmatprep.subr.bf16.mxu0 0
        %665 = vmatpush1.bf16.xpose.msra.mxu0 0
        %666 = vmatprep.subr.bf16.mxu0 0
        %667 = vmatpush1.bf16.xpose.msra.mxu0 0
        %668 = vmatprep.subr.bf16.mxu0 0
        %669 = vmatpush1.bf16.xpose.msra.mxu0 %v652
        %670 = vmatprep.subr.bf16.mxu0 0
        %671 = vmatpush2.bf16.xpose.msra.mxu0 0
        %672 = vmatprep.subr.bf16.mxu0 0
        %673 = vmatpush2.bf16.xpose.msra.mxu0 0
        %674 = vmatprep.subr.bf16.mxu0 0
        %675 = vmatpush2.bf16.xpose.msra.mxu0 0
        %676 = vmatprep.subr.bf16.mxu0 0
        %677 = vmatpush2.bf16.xpose.msra.mxu0 0
        %678 = vmatprep.subr.bf16.mxu0 0
        %679 = vmatpush2.bf16.xpose.msra.mxu0 0
        %680 = vmatprep.subr.bf16.mxu0 0
        %681 = vmatpush2.bf16.xpose.msra.mxu0 0
        %682 = vmatprep.subr.bf16.mxu0 0
        %683 = vmatpush2.bf16.xpose.msra.mxu0 0
        %684 = vmatprep.subr.bf16.mxu0 0
        %685 = vmatpush2.bf16.xpose.msra.mxu0 0
        %686 = vmatprep.mubr.bf16.mxu0 0
        %687 = vmatmul.mubr.bf16.gmra.mxu0 %v649
        %v688 = vpop.f32.mrf.mxu0
        %v689 = vadd.f32 0.0, %v688
        %v690 = vpop.f32.mrf.mxu0
        %v691 = vpop.f32.mrf.mxu0
        %v692 = vpop.f32.mrf.mxu0
        %693 = vdwg.mxu0
        %v694 = vsel %vm571, %v689, -inf
        %695 = vmax.xlane.f32.xlu0 %v694
        %v696 = vpop.xlane.xlu0 %695
        %v697 = vsub.f32 -inf, %v696
        %v698 = vmul.f32 %v697, 1.442695
        %v699 = vpow.pop %v698
        %v700 = vsub.f32 %v689, %v696
        %v701 = vpack.c.bf16 %v700, %v700
        %v703 = vmul.bf16 %v701, 1069105081
        %v704 = vpow.bf16.pop %v703
        %v705 = vmul.f32 %v699, 0.0
        %v706 = vunpack.c.l.bf16 %v704
        %v707 = vsel %vm571, %v706, 0.0
        %708 = vadd.xlane.f32.xlu0 %v707
        %v709 = vpop.xlane.xlu0 %708
        %v710 = vadd.f32 %v705, %v709
        %712 = vrot.lane.b32.xlu0 %v523, 112
        %v713 = vpop.permute.xlu0 %712
        %v715 = vsel %vm571, %v704, 0
        %v718 = vsel %vm592, %v713, 0
        %720 = vmatprep.subr.bf16.mxu0 0
        %721 = vmatpush1.bf16.msra.mxu0 0
        %722 = vmatprep.subr.bf16.mxu0 0
        %723 = vmatpush1.bf16.msra.mxu0 0
        %724 = vmatprep.subr.bf16.mxu0 0
        %725 = vmatpush1.bf16.msra.mxu0 0
        %726 = vmatprep.subr.bf16.mxu0 0
        %727 = vmatpush1.bf16.msra.mxu0 0
        %728 = vmatprep.subr.bf16.mxu0 0
        %729 = vmatpush1.bf16.msra.mxu0 0
        %730 = vmatprep.subr.bf16.mxu0 0
        %731 = vmatpush1.bf16.msra.mxu0 0
        %732 = vmatprep.subr.bf16.mxu0 0
        %733 = vmatpush1.bf16.msra.mxu0 0
        %734 = vmatprep.subr.bf16.mxu0 0
        %735 = vmatpush1.bf16.msra.mxu0 %v718
        %736 = vmatprep.subr.bf16.mxu0 0
        %737 = vmatpush2.bf16.msra.mxu0 0
        %738 = vmatprep.subr.bf16.mxu0 0
        %739 = vmatpush2.bf16.msra.mxu0 0
        %740 = vmatprep.subr.bf16.mxu0 0
        %741 = vmatpush2.bf16.msra.mxu0 0
        %742 = vmatprep.subr.bf16.mxu0 0
        %743 = vmatpush2.bf16.msra.mxu0 0
        %744 = vmatprep.subr.bf16.mxu0 0
        %745 = vmatpush2.bf16.msra.mxu0 0
        %746 = vmatprep.subr.bf16.mxu0 0
        %747 = vmatpush2.bf16.msra.mxu0 0
        %748 = vmatprep.subr.bf16.mxu0 0
        %749 = vmatpush2.bf16.msra.mxu0 0
        %750 = vmatprep.subr.bf16.mxu0 0
        %751 = vmatpush2.bf16.msra.mxu0 0
        %752 = vmatprep.mubr.bf16.mxu0 0
        %753 = vmatmul.mubr.bf16.gmra.mxu0 %v715
        %v754 = vpop.f32.mrf.mxu0
        %v755 = vadd.f32 0.0, %v754
        %v756 = vpop.f32.mrf.mxu0
        %v757 = vpop.f32.mrf.mxu0
        %v758 = vpop.f32.mrf.mxu0
        %759 = vdwg.mxu0
        %v760 = vadd.f32 %v705, %v755
        %v761 = vrcp.pop %v710
        %v762 = vmul.f32 %v760, %v761
        %v763 = vpack.c.bf16 %v762, %v762
        %v764 = vld [vmem:[%s6 + $0x8] sm:$0xf]
        %v765 = vld [vmem:[%s6 + $0xc] sm:$0xf]
        %v768 = vunpack.c.l.b16 %v764
        %v769 = vunpack.c.l.b16 %v765
        %v770 = vpack.c.b16 %v769, %v768
        %v773 = vsel %vm524, %v763, 0
        %775 = vmatprep.subr.bf16.mxu0 0
        %776 = vmatpush1.bf16.msra.mxu0 0
        %777 = vmatprep.subr.bf16.mxu0 0
        %778 = vmatpush1.bf16.msra.mxu0 0
        %779 = vmatprep.subr.bf16.mxu0 0
        %780 = vmatpush1.bf16.msra.mxu0 0
        %781 = vmatprep.subr.bf16.mxu0 0
        %782 = vmatpush1.bf16.msra.mxu0 0
        %783 = vmatprep.subr.bf16.mxu0 0
        %784 = vmatpush1.bf16.msra.mxu0 0
        %785 = vmatprep.subr.bf16.mxu0 0
        %786 = vmatpush1.bf16.msra.mxu0 0
        %787 = vmatprep.subr.bf16.mxu0 0
        %788 = vmatpush1.bf16.msra.mxu0 0
        %789 = vmatprep.subr.bf16.mxu0 0
        %790 = vmatpush1.bf16.msra.mxu0 %v770
        %791 = vmatprep.subr.bf16.mxu0 0
        %792 = vmatpush2.bf16.msra.mxu0 0
        %793 = vmatprep.subr.bf16.mxu0 0
        %794 = vmatpush2.bf16.msra.mxu0 0
        %795 = vmatprep.subr.bf16.mxu0 0
        %796 = vmatpush2.bf16.msra.mxu0 0
        %797 = vmatprep.subr.bf16.mxu0 0
        %798 = vmatpush2.bf16.msra.mxu0 0
        %799 = vmatprep.subr.bf16.mxu0 0
        %800 = vmatpush2.bf16.msra.mxu0 0
        %801 = vmatprep.subr.bf16.mxu0 0
        %802 = vmatpush2.bf16.msra.mxu0 0
        %803 = vmatprep.subr.bf16.mxu0 0
        %804 = vmatpush2.bf16.msra.mxu0 0
        %805 = vmatprep.subr.bf16.mxu0 0
        %806 = vmatpush2.bf16.msra.mxu0 0
        %807 = vmatprep.mubr.bf16.mxu0 0
        %808 = vmatmul.mubr.bf16.gmra.mxu0 %v773
        %v809 = vpop.f32.mrf.mxu0
        %v810 = vadd.f32 0.0, %v809
        %v811 = vpop.f32.mrf.mxu0
        %v812 = vpop.f32.mrf.mxu0
        %v813 = vpop.f32.mrf.mxu0
        %814 = vdwg.mxu0
        %v817 = vunpack.c.l.b16 %v640
        %v818 = vunpack.c.l.b16 %v641
        %v819 = vpack.c.b16 %v818, %v817
        %v822 = vsel %vm524, %v639, 0
        %824 = vmatprep.subr.bf16.mxu0 0
        %825 = vmatpush1.bf16.msra.mxu0 0
        %826 = vmatprep.subr.bf16.mxu0 0
        %827 = vmatpush1.bf16.msra.mxu0 0
        %828 = vmatprep.subr.bf16.mxu0 0
        %829 = vmatpush1.bf16.msra.mxu0 0
        %830 = vmatprep.subr.bf16.mxu0 0
        %831 = vmatpush1.bf16.msra.mxu0 0
        %832 = vmatprep.subr.bf16.mxu0 0
        %833 = vmatpush1.bf16.msra.mxu0 0
        %834 = vmatprep.subr.bf16.mxu0 0
        %835 = vmatpush1.bf16.msra.mxu0 0
        %836 = vmatprep.subr.bf16.mxu0 0
        %837 = vmatpush1.bf16.msra.mxu0 0
        %838 = vmatprep.subr.bf16.mxu0 0
        %839 = vmatpush1.bf16.msra.mxu0 %v819
        %840 = vmatprep.subr.bf16.mxu0 0
        %841 = vmatpush2.bf16.msra.mxu0 0
        %842 = vmatprep.subr.bf16.mxu0 0
        %843 = vmatpush2.bf16.msra.mxu0 0
        %844 = vmatprep.subr.bf16.mxu0 0
        %845 = vmatpush2.bf16.msra.mxu0 0
        %846 = vmatprep.subr.bf16.mxu0 0
        %847 = vmatpush2.bf16.msra.mxu0 0
        %848 = vmatprep.subr.bf16.mxu0 0
        %849 = vmatpush2.bf16.msra.mxu0 0
        %850 = vmatprep.subr.bf16.mxu0 0
        %851 = vmatpush2.bf16.msra.mxu0 0
        %852 = vmatprep.subr.bf16.mxu0 0
        %853 = vmatpush2.bf16.msra.mxu0 0
        %854 = vmatprep.subr.bf16.mxu0 0
        %855 = vmatpush2.bf16.msra.mxu0 0
        %856 = vmatprep.mubr.bf16.mxu0 0
        %857 = vmatmul.mubr.bf16.gmra.mxu0 %v822
        %v858 = vpop.f32.mrf.mxu0
        %v859 = vadd.f32 %v810, %v858
        %v860 = vpop.f32.mrf.mxu0
        %v861 = vpop.f32.mrf.mxu0
        %v862 = vpop.f32.mrf.mxu0
        %863 = vdwg.mxu0
        %864 = vrot.lane.b32.xlu0 %v409, 96
        %v865 = vpop.permute.xlu0 %864
        %866 = vrot.lane.b32.xlu0 %v466, 96
        %v867 = vpop.permute.xlu0 %866
        %v869 = vsel %vm524, %v865, 0
        %v872 = vsel %vm524, %v867, 0
        %874 = vmatprep.subr.bf16.mxu0 0
        %875 = vmatpush1.bf16.xpose.msra.mxu0 0
        %876 = vmatprep.subr.bf16.mxu0 0
        %877 = vmatpush1.bf16.xpose.msra.mxu0 0
        %878 = vmatprep.subr.bf16.mxu0 0
        %879 = vmatpush1.bf16.xpose.msra.mxu0 0
        %880 = vmatprep.subr.bf16.mxu0 0
        %881 = vmatpush1.bf16.xpose.msra.mxu0 0
        %882 = vmatprep.subr.bf16.mxu0 0
        %883 = vmatpush1.bf16.xpose.msra.mxu0 0
        %884 = vmatprep.subr.bf16.mxu0 0
        %885 = vmatpush1.bf16.xpose.msra.mxu0 0
        %886 = vmatprep.subr.bf16.mxu0 0
        %887 = vmatpush1.bf16.xpose.msra.mxu0 0
        %888 = vmatprep.subr.bf16.mxu0 0
        %889 = vmatpush1.bf16.xpose.msra.mxu0 %v872
        %890 = vmatprep.subr.bf16.mxu0 0
        %891 = vmatpush2.bf16.xpose.msra.mxu0 0
        %892 = vmatprep.subr.bf16.mxu0 0
        %893 = vmatpush2.bf16.xpose.msra.mxu0 0
        %894 = vmatprep.subr.bf16.mxu0 0
        %895 = vmatpush2.bf16.xpose.msra.mxu0 0
        %896 = vmatprep.subr.bf16.mxu0 0
        %897 = vmatpush2.bf16.xpose.msra.mxu0 0
        %898 = vmatprep.subr.bf16.mxu0 0
        %899 = vmatpush2.bf16.xpose.msra.mxu0 0
        %900 = vmatprep.subr.bf16.mxu0 0
        %901 = vmatpush2.bf16.xpose.msra.mxu0 0
        %902 = vmatprep.subr.bf16.mxu0 0
        %903 = vmatpush2.bf16.xpose.msra.mxu0 0
        %904 = vmatprep.subr.bf16.mxu0 0
        %905 = vmatpush2.bf16.xpose.msra.mxu0 0
        %906 = vmatprep.mubr.bf16.mxu0 0
        %907 = vmatmul.mubr.bf16.gmra.mxu0 %v869
        %v908 = vpop.f32.mrf.mxu0
        %v909 = vadd.f32 0.0, %v908
        %v910 = vpop.f32.mrf.mxu0
        %v911 = vpop.f32.mrf.mxu0
        %v912 = vpop.f32.mrf.mxu0
        %913 = vdwg.mxu0
        %v914 = vsel %vm571, %v909, -inf
        %915 = vmax.xlane.f32.xlu0 %v914
        %v916 = vpop.xlane.xlu0 %915
        %v917 = vsub.f32 -inf, %v916
        %v918 = vmul.f32 %v917, 1.442695
        %v919 = vpow.pop %v918
        %v920 = vsub.f32 %v909, %v916
        %v921 = vpack.c.bf16 %v920, %v920
        %v923 = vmul.bf16 %v921, 1069105081
        %v924 = vpow.bf16.pop %v923
        %v925 = vmul.f32 %v919, 0.0
        %v926 = vunpack.c.l.bf16 %v924
        %v927 = vsel %vm571, %v926, 0.0
        %928 = vadd.xlane.f32.xlu0 %v927
        %v929 = vpop.xlane.xlu0 %928
        %v930 = vadd.f32 %v925, %v929
        %931 = vrot.lane.b32.xlu0 %v523, 96
        %v932 = vpop.permute.xlu0 %931
        %v934 = vsel %vm571, %v924, 0
        %v937 = vsel %vm592, %v932, 0
        %939 = vmatprep.subr.bf16.mxu0 0
        %940 = vmatpush1.bf16.msra.mxu0 0
        %941 = vmatprep.subr.bf16.mxu0 0
        %942 = vmatpush1.bf16.msra.mxu0 0
        %943 = vmatprep.subr.bf16.mxu0 0
        %944 = vmatpush1.bf16.msra.mxu0 0
        %945 = vmatprep.subr.bf16.mxu0 0
        %946 = vmatpush1.bf16.msra.mxu0 0
        %947 = vmatprep.subr.bf16.mxu0 0
        %948 = vmatpush1.bf16.msra.mxu0 0
        %949 = vmatprep.subr.bf16.mxu0 0
        %950 = vmatpush1.bf16.msra.mxu0 0
        %951 = vmatprep.subr.bf16.mxu0 0
        %952 = vmatpush1.bf16.msra.mxu0 0
        %953 = vmatprep.subr.bf16.mxu0 0
        %954 = vmatpush1.bf16.msra.mxu0 %v937
        %955 = vmatprep.subr.bf16.mxu0 0
        %956 = vmatpush2.bf16.msra.mxu0 0
        %957 = vmatprep.subr.bf16.mxu0 0
        %958 = vmatpush2.bf16.msra.mxu0 0
        %959 = vmatprep.subr.bf16.mxu0 0
        %960 = vmatpush2.bf16.msra.mxu0 0
        %961 = vmatprep.subr.bf16.mxu0 0
        %962 = vmatpush2.bf16.msra.mxu0 0
        %963 = vmatprep.subr.bf16.mxu0 0
        %964 = vmatpush2.bf16.msra.mxu0 0
        %965 = vmatprep.subr.bf16.mxu0 0
        %966 = vmatpush2.bf16.msra.mxu0 0
        %967 = vmatprep.subr.bf16.mxu0 0
        %968 = vmatpush2.bf16.msra.mxu0 0
        %969 = vmatprep.subr.bf16.mxu0 0
        %970 = vmatpush2.bf16.msra.mxu0 0
        %971 = vmatprep.mubr.bf16.mxu0 0
        %972 = vmatmul.mubr.bf16.gmra.mxu0 %v934
        %v973 = vpop.f32.mrf.mxu0
        %v974 = vadd.f32 0.0, %v973
        %v975 = vpop.f32.mrf.mxu0
        %v976 = vpop.f32.mrf.mxu0
        %v977 = vpop.f32.mrf.mxu0
        %978 = vdwg.mxu0
        %v979 = vadd.f32 %v925, %v974
        %v980 = vrcp.pop %v930
        %v981 = vmul.f32 %v979, %v980
        %v982 = vpack.c.bf16 %v981, %v981
        %v983 = vld [vmem:[%s6 + $0x10] sm:$0xf]
        %v984 = vld [vmem:[%s6 + $0x14] sm:$0xf]
        %v987 = vunpack.c.l.b16 %v983
        %v988 = vunpack.c.l.b16 %v984
        %v989 = vpack.c.b16 %v988, %v987
        %v992 = vsel %vm524, %v982, 0
        %994 = vmatprep.subr.bf16.mxu0 0
        %995 = vmatpush1.bf16.msra.mxu0 0
        %996 = vmatprep.subr.bf16.mxu0 0
        %997 = vmatpush1.bf16.msra.mxu0 0
        %998 = vmatprep.subr.bf16.mxu0 0
        %999 = vmatpush1.bf16.msra.mxu0 0
        %1000 = vmatprep.subr.bf16.mxu0 0
        %1001 = vmatpush1.bf16.msra.mxu0 0
        %1002 = vmatprep.subr.bf16.mxu0 0
        %1003 = vmatpush1.bf16.msra.mxu0 0
        %1004 = vmatprep.subr.bf16.mxu0 0
        %1005 = vmatpush1.bf16.msra.mxu0 0
        %1006 = vmatprep.subr.bf16.mxu0 0
        %1007 = vmatpush1.bf16.msra.mxu0 0
        %1008 = vmatprep.subr.bf16.mxu0 0
        %1009 = vmatpush1.bf16.msra.mxu0 %v989
        %1010 = vmatprep.subr.bf16.mxu0 0
        %1011 = vmatpush2.bf16.msra.mxu0 0
        %1012 = vmatprep.subr.bf16.mxu0 0
        %1013 = vmatpush2.bf16.msra.mxu0 0
        %1014 = vmatprep.subr.bf16.mxu0 0
        %1015 = vmatpush2.bf16.msra.mxu0 0
        %1016 = vmatprep.subr.bf16.mxu0 0
        %1017 = vmatpush2.bf16.msra.mxu0 0
        %1018 = vmatprep.subr.bf16.mxu0 0
        %1019 = vmatpush2.bf16.msra.mxu0 0
        %1020 = vmatprep.subr.bf16.mxu0 0
        %1021 = vmatpush2.bf16.msra.mxu0 0
        %1022 = vmatprep.subr.bf16.mxu0 0
        %1023 = vmatpush2.bf16.msra.mxu0 0
        %1024 = vmatprep.subr.bf16.mxu0 0
        %1025 = vmatpush2.bf16.msra.mxu0 0
        %1026 = vmatprep.mubr.bf16.mxu0 0
        %1027 = vmatmul.mubr.bf16.gmra.mxu0 %v992
        %v1028 = vpop.f32.mrf.mxu0
        %v1029 = vadd.f32 0.0, %v1028
        %v1030 = vpop.f32.mrf.mxu0
        %v1031 = vpop.f32.mrf.mxu0
        %v1032 = vpop.f32.mrf.mxu0
        %1033 = vdwg.mxu0
        %v1034 = vadd.f32 %v859, %v1029
        %1035 = vrot.lane.b32.xlu0 %v409, 80
        %v1036 = vpop.permute.xlu0 %1035
        %1037 = vrot.lane.b32.xlu0 %v466, 80
        %v1038 = vpop.permute.xlu0 %1037
        %v1040 = vsel %vm524, %v1036, 0
        %v1043 = vsel %vm524, %v1038, 0
        %1045 = vmatprep.subr.bf16.mxu0 0
        %1046 = vmatpush1.bf16.xpose.msra.mxu0 0
        %1047 = vmatprep.subr.bf16.mxu0 0
        %1048 = vmatpush1.bf16.xpose.msra.mxu0 0
        %1049 = vmatprep.subr.bf16.mxu0 0
        %1050 = vmatpush1.bf16.xpose.msra.mxu0 0
        %1051 = vmatprep.subr.bf16.mxu0 0
        %1052 = vmatpush1.bf16.xpose.msra.mxu0 0
        %1053 = vmatprep.subr.bf16.mxu0 0
        %1054 = vmatpush1.bf16.xpose.msra.mxu0 0
        %1055 = vmatprep.subr.bf16.mxu0 0
        %1056 = vmatpush1.bf16.xpose.msra.mxu0 0
        %1057 = vmatprep.subr.bf16.mxu0 0
        %1058 = vmatpush1.bf16.xpose.msra.mxu0 0
        %1059 = vmatprep.subr.bf16.mxu0 0
        %1060 = vmatpush1.bf16.xpose.msra.mxu0 %v1043
        %1061 = vmatprep.subr.bf16.mxu0 0
        %1062 = vmatpush2.bf16.xpose.msra.mxu0 0
        %1063 = vmatprep.subr.bf16.mxu0 0
        %1064 = vmatpush2.bf16.xpose.msra.mxu0 0
        %1065 = vmatprep.subr.bf16.mxu0 0
        %1066 = vmatpush2.bf16.xpose.msra.mxu0 0
        %1067 = vmatprep.subr.bf16.mxu0 0
        %1068 = vmatpush2.bf16.xpose.msra.mxu0 0
        %1069 = vmatprep.subr.bf16.mxu0 0
        %1070 = vmatpush2.bf16.xpose.msra.mxu0 0
        %1071 = vmatprep.subr.bf16.mxu0 0
        %1072 = vmatpush2.bf16.xpose.msra.mxu0 0
        %1073 = vmatprep.subr.bf16.mxu0 0
        %1074 = vmatpush2.bf16.xpose.msra.mxu0 0
        %1075 = vmatprep.subr.bf16.mxu0 0
        %1076 = vmatpush2.bf16.xpose.msra.mxu0 0
        %1077 = vmatprep.mubr.bf16.mxu0 0
        %1078 = vmatmul.mubr.bf16.gmra.mxu0 %v1040
        %v1079 = vpop.f32.mrf.mxu0
        %v1080 = vadd.f32 0.0, %v1079
        %v1081 = vpop.f32.mrf.mxu0
        %v1082 = vpop.f32.mrf.mxu0
        %v1083 = vpop.f32.mrf.mxu0
        %1084 = vdwg.mxu0
        %v1085 = vsel %vm571, %v1080, -inf
        %1086 = vmax.xlane.f32.xlu0 %v1085
        %v1087 = vpop.xlane.xlu0 %1086
        %v1088 = vsub.f32 -inf, %v1087
        %v1089 = vmul.f32 %v1088, 1.442695
        %v1090 = vpow.pop %v1089
        %v1091 = vsub.f32 %v1080, %v1087
        %v1092 = vpack.c.bf16 %v1091, %v1091
        %v1094 = vmul.bf16 %v1092, 1069105081
        %v1095 = vpow.bf16.pop %v1094
        %v1096 = vmul.f32 %v1090, 0.0
        %v1097 = vunpack.c.l.bf16 %v1095
        %v1098 = vsel %vm571, %v1097, 0.0
        %1099 = vadd.xlane.f32.xlu0 %v1098
        %v1100 = vpop.xlane.xlu0 %1099
        %v1101 = vadd.f32 %v1096, %v1100
        %1102 = vrot.lane.b32.xlu0 %v523, 80
        %v1103 = vpop.permute.xlu0 %1102
        %v1105 = vsel %vm571, %v1095, 0
        %v1108 = vsel %vm592, %v1103, 0
        %1110 = vmatprep.subr.bf16.mxu0 0
        %1111 = vmatpush1.bf16.msra.mxu0 0
        %1112 = vmatprep.subr.bf16.mxu0 0
        %1113 = vmatpush1.bf16.msra.mxu0 0
        %1114 = vmatprep.subr.bf16.mxu0 0
        %1115 = vmatpush1.bf16.msra.mxu0 0
        %1116 = vmatprep.subr.bf16.mxu0 0
        %1117 = vmatpush1.bf16.msra.mxu0 0
        %1118 = vmatprep.subr.bf16.mxu0 0
        %1119 = vmatpush1.bf16.msra.mxu0 0
        %1120 = vmatprep.subr.bf16.mxu0 0
        %1121 = vmatpush1.bf16.msra.mxu0 0
        %1122 = vmatprep.subr.bf16.mxu0 0
        %1123 = vmatpush1.bf16.msra.mxu0 0
        %1124 = vmatprep.subr.bf16.mxu0 0
        %1125 = vmatpush1.bf16.msra.mxu0 %v1108
        %1126 = vmatprep.subr.bf16.mxu0 0
        %1127 = vmatpush2.bf16.msra.mxu0 0
        %1128 = vmatprep.subr.bf16.mxu0 0
        %1129 = vmatpush2.bf16.msra.mxu0 0
        %1130 = vmatprep.subr.bf16.mxu0 0
        %1131 = vmatpush2.bf16.msra.mxu0 0
        %1132 = vmatprep.subr.bf16.mxu0 0
        %1133 = vmatpush2.bf16.msra.mxu0 0
        %1134 = vmatprep.subr.bf16.mxu0 0
        %1135 = vmatpush2.bf16.msra.mxu0 0
        %1136 = vmatprep.subr.bf16.mxu0 0
        %1137 = vmatpush2.bf16.msra.mxu0 0
        %1138 = vmatprep.subr.bf16.mxu0 0
        %1139 = vmatpush2.bf16.msra.mxu0 0
        %1140 = vmatprep.subr.bf16.mxu0 0
        %1141 = vmatpush2.bf16.msra.mxu0 0
        %1142 = vmatprep.mubr.bf16.mxu0 0
        %1143 = vmatmul.mubr.bf16.gmra.mxu0 %v1105
        %v1144 = vpop.f32.mrf.mxu0
        %v1145 = vadd.f32 0.0, %v1144
        %v1146 = vpop.f32.mrf.mxu0
        %v1147 = vpop.f32.mrf.mxu0
        %v1148 = vpop.f32.mrf.mxu0
        %1149 = vdwg.mxu0
        %v1150 = vadd.f32 %v1096, %v1145
        %v1151 = vrcp.pop %v1101
        %v1152 = vmul.f32 %v1150, %v1151
        %v1153 = vpack.c.bf16 %v1152, %v1152
        %v1154 = vld [vmem:[%s6 + $0x18] sm:$0xf]
        %v1155 = vld [vmem:[%s6 + $0x1c] sm:$0xf]
        %v1158 = vunpack.c.l.b16 %v1154
        %v1159 = vunpack.c.l.b16 %v1155
        %v1160 = vpack.c.b16 %v1159, %v1158
        %v1163 = vsel %vm524, %v1153, 0
        %1165 = vmatprep.subr.bf16.mxu0 0
        %1166 = vmatpush1.bf16.msra.mxu0 0
        %1167 = vmatprep.subr.bf16.mxu0 0
        %1168 = vmatpush1.bf16.msra.mxu0 0
        %1169 = vmatprep.subr.bf16.mxu0 0
        %1170 = vmatpush1.bf16.msra.mxu0 0
        %1171 = vmatprep.subr.bf16.mxu0 0
        %1172 = vmatpush1.bf16.msra.mxu0 0
        %1173 = vmatprep.subr.bf16.mxu0 0
        %1174 = vmatpush1.bf16.msra.mxu0 0
        %1175 = vmatprep.subr.bf16.mxu0 0
        %1176 = vmatpush1.bf16.msra.mxu0 0
        %1177 = vmatprep.subr.bf16.mxu0 0
        %1178 = vmatpush1.bf16.msra.mxu0 0
        %1179 = vmatprep.subr.bf16.mxu0 0
        %1180 = vmatpush1.bf16.msra.mxu0 %v1160
        %1181 = vmatprep.subr.bf16.mxu0 0
        %1182 = vmatpush2.bf16.msra.mxu0 0
        %1183 = vmatprep.subr.bf16.mxu0 0
        %1184 = vmatpush2.bf16.msra.mxu0 0
        %1185 = vmatprep.subr.bf16.mxu0 0
        %1186 = vmatpush2.bf16.msra.mxu0 0
        %1187 = vmatprep.subr.bf16.mxu0 0
        %1188 = vmatpush2.bf16.msra.mxu0 0
        %1189 = vmatprep.subr.bf16.mxu0 0
        %1190 = vmatpush2.bf16.msra.mxu0 0
        %1191 = vmatprep.subr.bf16.mxu0 0
        %1192 = vmatpush2.bf16.msra.mxu0 0
        %1193 = vmatprep.subr.bf16.mxu0 0
        %1194 = vmatpush2.bf16.msra.mxu0 0
        %1195 = vmatprep.subr.bf16.mxu0 0
        %1196 = vmatpush2.bf16.msra.mxu0 0
        %1197 = vmatprep.mubr.bf16.mxu0 0
        %1198 = vmatmul.mubr.bf16.gmra.mxu0 %v1163
        %v1199 = vpop.f32.mrf.mxu0
        %v1200 = vadd.f32 0.0, %v1199
        %v1201 = vpop.f32.mrf.mxu0
        %v1202 = vpop.f32.mrf.mxu0
        %v1203 = vpop.f32.mrf.mxu0
        %1204 = vdwg.mxu0
        %v1205 = vadd.f32 %v1034, %v1200
        %v1206 = vld [vmem:[%s7] sm:$0x1]
        %v1208 = vlaneseq
        %v1209 = vshrl.u32 %v1208, 7
        %v1210 = vsub.s32 0, %v1209
        %v1211 = vrot.slane %v1206, %v1210
        %v1213 = vadd.f32 %v1205, %v1211
        %1214 = vst.msk [vmem:[%s311] sm:$0xff] %vm318, %v1213
        %s1215 = sand.u32 %s204, 1
        %s1216 = scalar_lea.sflag [#allocation4], %s1215
        %s1217 = sand.u32 %s204, 1
        %s1218 = smul.addr %s1217, 8
        %s1219 = scalar_lea.vmem [#allocation5], %s1218
        // Predicated region
        $region57: #{tpu_custom_call.1} parent=51 // pred_check
          %p1220 = pneg %p214
        $region58: #{tpu_custom_call.1} parent=51 // pred_check_branch
          %1222 = sbr.rel (%p1220) target = $region60
        $region59: #{tpu_custom_call.1} parent=51 // pred_region
          %s1224 = ssub.s32 128, 128
          %1225 = vsyncadd %s1216, %s1224
          %s1226 = smul.addr %s23, 128
          %s1227 = scalar_lea.hbm %s8, %s1226
          %s1229 = sshll.u32 %s1219, 4
          %s1230 = int_to_ptr.vmem [resolvable:$true] %s1229
          %1232 = dma.vmem_to_hbm [thread:$0]  %s1230, 128, %s1227, %s1216
        $region60: #{tpu_custom_call.1} parent=51 // pred_fallthru
          _
      $region52: #{tpu_custom_call.1} parent=5 // pred_fallthru
        _
      %p1233 = scmp.le.s32.totalorder 2, %s18
      // Predicated region
      $region61: #{tpu_custom_call.1} parent=5 // pred_check
        %p1234 = pneg %p1233
      $region62: #{tpu_custom_call.1} parent=5 // pred_check_branch
        %1236 = sbr.rel (%p1234) target = $region64
      $region63: #{tpu_custom_call.1} parent=5 // pred_region
        %s1237 = ssub.s32 %s18, 2
        // Predicated region
        $region65: #{tpu_custom_call.1} parent=63 // pred_check
          %p1238 = pneg %p220
        $region66: #{tpu_custom_call.1} parent=63 // pred_check_branch
          %1240 = sbr.rel (%p1238) target = $region68
        $region67: #{tpu_custom_call.1} parent=63 // pred_region
          %s1241 = sand.u32 %s205, 1
          %s1242 = scalar_lea.sflag [#allocation4], %s1241
          %s1243 = sand.u32 %s205, 1
          %s1244 = smul.addr %s1243, 8
          %s1245 = scalar_lea.vmem [#allocation5], %s1244
          %1246 = dma.done %s1242, 128
        $region68: #{tpu_custom_call.1} parent=63 // pred_fallthru
          _
      $region64: #{tpu_custom_call.1} parent=5 // pred_fallthru
        _
    $region6: #{tpu_custom_call.1} parent=1 // loop_footer
      %s22 = sadd.s32 1, %s18
    $region7: #{tpu_custom_call.1} parent=1 // loop_footer_branch
      %17 = sbr.rel target = $region3
    $region8: #{tpu_custom_call.1} parent=1 // loop_exit
      _
    %1247 = vsyncpa [#allocation3], 1
    %s1248 = scalar_lea.sflag [#allocation3], 1
    %1249 = vsyncpa %s1248, 1
    %1250 = vsyncpa [#allocation4], 1
    %s1251 = scalar_lea.sflag [#allocation4], 1
    %1252 = vsyncpa %s1251, 1

</llo_original>
